<compile_context>
chip_gen: v5e
topology: v5e:2x2
jax: 0.10.0
libtpu: 0.0.40
codegen_flags: <defaults>
</compile_context>

<pallas_src>
import math

import jax
import jax.numpy as jnp
from jax import lax
from jax.experimental import pallas as pl
from jax.experimental.pallas import tpu as pltpu


def _round_up(x, m):
    return ((x + m - 1) // m) * m


# --------------------------------------------------------------------------
# Kernel
# --------------------------------------------------------------------------
def _read_memory_kernel(l_ref, ms_ref, bias_ref, r_ref, bsq_ref, mv_ref,
                        out_ref, m_sc, l_sc, acc_sc):
    """One grid step: (batch b, query tile p, memory tile n).

    l_ref   : (2CK, N_t)  sim   fused memory operand [-mk*mk ; 2*mk] (hoisted)
    ms_ref  : (1,  N_t)   f32   shrinkage, pre-scaled by 1/sqrt(CK)
    bias_ref: (1,  N_t)   f32   0 for valid memory cols, -1e30 for padding
    r_ref   : (P_t, 2CK)  sim   fused query operand [qe | qk*qe]
    bsq_ref : (P_t, 1)    f32   sum_c qe*qk^2
    mv_ref  : (N_t, CVt)  bf16  memory value tile (channel-last)
    out_ref : (P_t, CVt)  bf16  readout (written on last N tile)
    scratch : m_sc/l_sc (P_t,1) f32, acc_sc (P_t, CVt) f32
    """
    n_idx = pl.program_id(2)

    # ---- init running stats / accumulator for this (b, p) tile ----
    @pl.when(n_idx == 0)
    def _init():
        m_sc[...] = jnp.full(m_sc.shape, -jnp.inf, dtype=jnp.float32)
        l_sc[...] = jnp.zeros(l_sc.shape, dtype=jnp.float32)
        acc_sc[...] = jnp.zeros(acc_sc.shape, dtype=jnp.float32)

    # ---- fused similarity: single 2*CK-deep MXU contraction ----
    sim = jnp.dot(r_ref[...], l_ref[...],
                  preferred_element_type=jnp.float32)                 # (P_t, N_t)
    sim = (sim - bsq_ref[...]) * ms_ref[...] + bias_ref[...]

    # ---- online softmax over the memory (lane) axis ----
    m_prev = m_sc[...]
    m_new = jnp.maximum(m_prev, jnp.max(sim, axis=1, keepdims=True))  # (P_t,1)
    alpha = jnp.exp(m_prev - m_new)
    p = jnp.exp(sim - m_new)                                          # (P_t,N_t)
    l_sc[...] = alpha * l_sc[...] + jnp.sum(p, axis=1, keepdims=True)
    acc_sc[...] = alpha * acc_sc[...] + jnp.dot(
        p.astype(mv_ref.dtype), mv_ref[...],
        preferred_element_type=jnp.float32)                           # (P_t,CVt)
    m_sc[...] = m_new

    # ---- finalize: deferred softmax normalization ----
    @pl.when(n_idx == pl.num_programs(2) - 1)
    def _finalize():
        inv_l = pl.reciprocal(l_sc[...], approx=True)
        out_ref[...] = (acc_sc[...] * inv_l).astype(out_ref.dtype)


# --------------------------------------------------------------------------
# Tile selection (VMEM-budgeted, megacore-aware)
# --------------------------------------------------------------------------
def _vmem_bytes(p_tile, n_tile, ck2, cvt, sim_bytes):
    db = 2  # BlockSpec double-buffering
    return (db * ck2 * n_tile * sim_bytes          # L
            + db * 2 * n_tile * 4                  # ms + bias
            + db * p_tile * ck2 * sim_bytes        # r
            + db * p_tile * 4                      # bsq
            + db * n_tile * cvt * 2                # mv (bf16)
            + db * p_tile * cvt * 2                # out (bf16)
            + p_tile * cvt * 4                     # acc scratch
            + 2 * p_tile * 4)                      # m / l scratch


def _pick_tiles(P_pad, N, B, ck2, cvt, n_tile_req, p_tile_req, sim_bytes,
                budget_bytes=40 * 1024 * 1024):
    # n_tile: multiple of 128, no larger than the padded memory extent.
    n_tile = max(128, min(n_tile_req, _round_up(N, 128)))
    n_tile = _round_up(n_tile, 128)
    # p_tile: largest tile dividing P_pad, but keep >= 2 parallel tiles
    # overall so both v7x TensorCores get work.
    cands = [c for c in (1024, 512, 256, 128)
             if c <= max(p_tile_req, 128) and P_pad % c == 0] or [128]
    p_tile = cands[0]
    if B * (P_pad // p_tile) < 2:
        for c in cands:
            if B * (P_pad // c) >= 2:
                p_tile = c
                break
    # shrink until the footprint fits the budget (v7x has only 64 MiB/TC).
    while _vmem_bytes(p_tile, n_tile, ck2, cvt, sim_bytes) > budget_bytes:
        if p_tile > 128:
            p_tile //= 2
        elif n_tile > 128:
            n_tile = max(128, _round_up(n_tile // 2, 128))
        else:
            break
    return p_tile, n_tile


# --------------------------------------------------------------------------
# Wrapper (mirrors XMem.read_memory)
# --------------------------------------------------------------------------
def read_memory_pallas(query_key, query_selection, memory_key,
                       memory_shrinkage, memory_value,
                       *, n_tile=1024, p_tile=1024,
                       sim_dtype=jnp.float32, out_dtype=jnp.float32,
                       interpret=False):
    """
    query_key       : B x CK x H x W
    query_selection : B x CK x H x W
    memory_key      : B x CK x T x H x W
    memory_shrinkage: B x 1  x T x H x W
    memory_value    : B x num_objects x CV x T x H x W
    returns         : B x num_objects x CV x H x W
    """
    B, num_objects, CV, T, H, W = memory_value.shape
    CK = memory_key.shape[1]
    N = T * H * W
    P = H * W
    CVt = num_objects * CV
    ck2 = 2 * CK

    # ---- one-time layout plumbing / operand fusion (outside the kernel) ----
    mk = memory_key.reshape(B, CK, N).astype(jnp.float32)
    # fused memory operand [-mk*mk ; 2*mk], built once, streamed MXU-ready
    l_op = jnp.concatenate([-(mk * mk), 2.0 * mk], axis=1).astype(sim_dtype)
    # shrinkage pre-scaled by 1/sqrt(CK)
    ms = (memory_shrinkage.reshape(B, 1, N).astype(jnp.float32)
          * (1.0 / math.sqrt(CK)))
    qk_t = jnp.swapaxes(query_key.reshape(B, CK, P), 1, 2).astype(jnp.float32)
    qe_t = jnp.swapaxes(query_selection.reshape(B, CK, P), 1, 2).astype(jnp.float32)
    r = jnp.concatenate([qe_t, qk_t * qe_t], axis=2).astype(sim_dtype)  # (B,P,2CK)
    bsq = jnp.sum(qe_t * qk_t * qk_t, axis=2, keepdims=True)            # (B,P,1)
    # memory value channel-last bf16 -> plain A@B readout contraction
    mv = jnp.swapaxes(memory_value.reshape(B, CVt, N), 1, 2).astype(jnp.bfloat16)

    # ---- tiling / padding ----
    P_pad = _round_up(P, 128)
    sim_bytes = jnp.dtype(sim_dtype).itemsize
    p_tile, n_tile = _pick_tiles(P_pad, N, B, ck2, CVt, n_tile, p_tile, sim_bytes)
    N_pad = _round_up(N, n_tile)

    if P_pad != P:
        r = jnp.pad(r, ((0, 0), (0, P_pad - P), (0, 0)))
        bsq = jnp.pad(bsq, ((0, 0), (0, P_pad - P), (0, 0)))
    if N_pad != N:
        l_op = jnp.pad(l_op, ((0, 0), (0, 0), (0, N_pad - N)))
        ms = jnp.pad(ms, ((0, 0), (0, 0), (0, N_pad - N)))
        mv = jnp.pad(mv, ((0, 0), (0, N_pad - N), (0, 0)))
    # additive mask for padded memory columns (replaces in-kernel iota/select)
    bias = jnp.where(jnp.arange(N_pad) < N, 0.0, -1e30).astype(jnp.float32)[None, :]

    grid = (B, P_pad // p_tile, N_pad // n_tile)
    n_p_tiles = P_pad // p_tile

    flops = 2 * B * P_pad * N_pad * (ck2 + CVt)
    # memory-side arrays are re-streamed once per query tile
    bytes_accessed = (n_p_tiles * (l_op.size * sim_bytes + ms.size * 4
                                   + mv.size * 2 + bias.size * 4)
                      + r.size * sim_bytes + bsq.size * 4
                      + B * P_pad * CVt * 2)

    out = pl.pallas_call(
        _read_memory_kernel,
        out_shape=jax.ShapeDtypeStruct((B, P_pad, CVt), jnp.bfloat16),
        grid_spec=pltpu.PrefetchScalarGridSpec(
            num_scalar_prefetch=0,
            grid=grid,
            in_specs=[
                pl.BlockSpec((None, ck2, n_tile), lambda b, p, n: (b, 0, n)),   # L
                pl.BlockSpec((None, 1, n_tile), lambda b, p, n: (b, 0, n)),     # ms
                pl.BlockSpec((1, n_tile), lambda b, p, n: (0, n)),              # bias
                pl.BlockSpec((None, p_tile, ck2), lambda b, p, n: (b, p, 0)),   # r
                pl.BlockSpec((None, p_tile, 1), lambda b, p, n: (b, p, 0)),     # bsq
                # NOTE: if xprof shows exposed DMA on this (largest) stream,
                # add pipeline_mode=pl.Buffered(3) here.
                pl.BlockSpec((None, n_tile, CVt), lambda b, p, n: (b, n, 0)),   # mv
            ],
            out_specs=pl.BlockSpec((None, p_tile, CVt), lambda b, p, n: (b, p, 0)),
            scratch_shapes=[
                pltpu.VMEM((p_tile, 1), jnp.float32),     # running max
                pltpu.VMEM((p_tile, 1), jnp.float32),     # running denom
                pltpu.VMEM((p_tile, CVt), jnp.float32),   # readout accumulator
            ],
        ),
        compiler_params=pltpu.CompilerParams(
            dimension_semantics=("parallel", "parallel", "arbitrary"),
            vmem_limit_bytes=48 * 1024 * 1024),
        cost_estimate=pl.CostEstimate(
            flops=flops,
            transcendentals=B * P_pad * N_pad,
            bytes_accessed=bytes_accessed),
        interpret=interpret,
    )(l_op, ms, bias, r, bsq, mv)

    mem = jnp.swapaxes(out[:, :P, :], 1, 2).astype(out_dtype)   # (B, CVt, P)
    # use CV from the input shape (not config value_dim) for the reshape
    return mem.reshape(B, num_objects, CV, H, W)


# --------------------------------------------------------------------------
# Pure-JAX f32 reference (verification)
# --------------------------------------------------------------------------
def read_memory_reference(query_key, query_selection, memory_key,
                          memory_shrinkage, memory_value):
    """Pure-JAX f32 replica of torch get_affinity + readout."""
    B, num_objects, CV, T, H, W = memory_value.shape
    CK = memory_key.shape[1]
    N = T * H * W
    P = H * W

    mk = memory_key.reshape(B, CK, N).astype(jnp.float32)
    ms = memory_shrinkage.reshape(B, N)[:, :, None].astype(jnp.float32)
    qk = query_key.reshape(B, CK, P).astype(jnp.float32)
    qe = query_selection.reshape(B, CK, P).astype(jnp.float32)
    mv = memory_value.reshape(B, num_objects * CV, N).astype(jnp.float32)

    mk_t = jnp.swapaxes(mk, 1, 2)                              # (B, N, CK)
    a_sq = jnp.einsum('bnc,bcp->bnp', mk_t ** 2, qe)
    two_ab = 2.0 * jnp.einsum('bnc,bcp->bnp', mk_t, qk * qe)
    b_sq = jnp.sum(qe * qk ** 2, axis=1, keepdims=True)        # (B, 1, P)
    sim = (-a_sq + two_ab - b_sq) * ms / math.sqrt(CK)

    maxes = jnp.max(sim, axis=1, keepdims=True)
    e = jnp.exp(sim - maxes)
    affinity = e / jnp.sum(e, axis=1, keepdims=True)

    mem = jnp.einsum('bcn,bnp->bcp', mv, affinity)
    return mem.reshape(B, num_objects, CV, H, W)


# --------------------------------------------------------------------------
# Minimal XMem-like dispatcher (read_memory is Pallas-accelerated)
# --------------------------------------------------------------------------
class XMemPallas:
    def __init__(self, config):
        self.config = config
        self.key_dim = config.get('key_dim', 64)
        self.value_dim = config.get('value_dim', 512)
        self.hidden_dim = config.get('hidden_dim', 64)
        self.single_object = config.get('single_object', False)
        # read_memory has no learnable parameters.
        # TODO(synk): encode_key / encode_value / segment / enhance_key require
        # ResNet backbones, the GRU decoder and MSDeformAttn (external modules).

    def forward(self, mode, *args, **kwargs):
        if mode == 'read_memory':
            return self.read_memory(*args, **kwargs)
        raise NotImplementedError(f"mode '{mode}' not implemented in Pallas port")

    def read_memory(self, query_key, query_selection, memory_key,
                    memory_shrinkage, memory_value):
        return read_memory_pallas(query_key, query_selection, memory_key,
                                  memory_shrinkage, memory_value)


if __name__ == "__main__":
    # Small shapes consistent with XMem.read_memory's contract.
    B, num_objects = 2, 2
    CK, CV = 32, 32            # key_dim, value_dim (set via config)
    T, H, W = 2, 8, 8

    config = {'key_dim': CK, 'value_dim': CV, 'hidden_dim': 16,
              'use_IS': False, 'share_backbone': False}
    model = XMemPallas(config)

    key = jax.random.PRNGKey(0)
    k_qk, k_qe, k_mk, k_ms, k_mv = jax.random.split(key, 5)

    query_key = jax.random.normal(k_qk, (B, CK, H, W), dtype=jnp.float32)
    # selection is a sigmoid output in the real model -> keep it in (0, 1)
    query_selection = jax.nn.sigmoid(
        jax.random.normal(k_qe, (B, CK, H, W), dtype=jnp.float32))
    memory_key = jax.random.normal(k_mk, (B, CK, T, H, W), dtype=jnp.float32)
    # shrinkage is d_proj(x)**2 + 1 in the real model -> >= 1
    memory_shrinkage = jax.random.normal(
        k_ms, (B, 1, T, H, W), dtype=jnp.float32) ** 2 + 1.0
    memory_value = jax.random.normal(
        k_mv, (B, num_objects, CV, T, H, W), dtype=jnp.float32)

    out = model.forward('read_memory', query_key, query_selection,
                        memory_key, memory_shrinkage, memory_value)
    out = jax.block_until_ready(out)

    ref = read_memory_reference(query_key, query_selection, memory_key,
                                memory_shrinkage, memory_value)
    assert out.shape == (B, num_objects, CV, H, W), out.shape
    # bf16 readout/output + approx reciprocal vs f32 reference -> relaxed tol
    max_err = float(jnp.max(jnp.abs(out - ref)))
    assert jnp.allclose(out, ref, atol=2e-2, rtol=2e-2), max_err

    print("KERNEL_OK")
</pallas_src>

<mosaic_0001>
module attributes {stable_mosaic.version = 11 : i64} {
  func.func @_read_memory_kernel(%arg0: i32, %arg1: i32, %arg2: i32, %arg3: memref<1x64x128xf32, #tpu.memory_space<vmem>>, %arg4: memref<1x1x128xf32, #tpu.memory_space<vmem>>, %arg5: memref<1x128xf32, #tpu.memory_space<vmem>>, %arg6: memref<1x128x64xf32, #tpu.memory_space<vmem>>, %arg7: memref<1x128x1xf32, #tpu.memory_space<vmem>>, %arg8: memref<1x128x64xbf16, #tpu.memory_space<vmem>>, %arg9: memref<1x128x64xbf16, #tpu.memory_space<vmem>>, %arg10: memref<128x1xf32, #tpu.memory_space<vmem>>, %arg11: memref<128x1xf32, #tpu.memory_space<vmem>>, %arg12: memref<128x64xf32, #tpu.memory_space<vmem>>) attributes {dimension_semantics = [#tpu.dimension_semantics<parallel>, #tpu.dimension_semantics<parallel>, #tpu.dimension_semantics<arbitrary>], iteration_bounds = array<i64: 2, 1, 1>, scalar_prefetch = 0 : i64, scratch_operands = 3 : i64, tpu.core_type = #tpu.core_type<tc>, window_params = [{transform_indices = @transform_0, window_bounds = array<i64: 1, 64, 128>}, {transform_indices = @transform_1, window_bounds = array<i64: 1, 1, 128>}, {transform_indices = @transform_2, window_bounds = array<i64: 1, 128>}, {transform_indices = @transform_3, window_bounds = array<i64: 1, 128, 64>}, {transform_indices = @transform_4, window_bounds = array<i64: 1, 128, 1>}, {transform_indices = @transform_5, window_bounds = array<i64: 1, 128, 64>}, {transform_indices = @transform_6, window_bounds = array<i64: 1, 128, 64>}]} {
    %c0_i32 = arith.constant 0 : i32
    %0 = arith.cmpi eq, %arg2, %c0_i32 : i32
    %1 = arith.extui %0 : i1 to i32
    %c0_i32_0 = arith.constant 0 : i32
    %2 = arith.cmpi ne, %1, %c0_i32_0 : i32
    scf.if %2 {
      %cst_34 = arith.constant 0xFF800000 : f32
      %47 = vector.broadcast %cst_34 : f32 to vector<128x1xf32>
      %c0_35 = arith.constant 0 : index
      %c0_36 = arith.constant 0 : index
      %48 = vector.load %arg10[%c0_35, %c0_36] : memref<128x1xf32, #tpu.memory_space<vmem>>, vector<128x1xf32>
      tpu.vector_store %arg10[%c0_35, %c0_36], %47 {strides = array<i32>} : memref<128x1xf32, #tpu.memory_space<vmem>>, vector<128x1xf32>,
      %cst_37 = arith.constant 0.000000e+00 : f32
      %49 = vector.broadcast %cst_37 : f32 to vector<128x1xf32>
      %c0_38 = arith.constant 0 : index
      %c0_39 = arith.constant 0 : index
      %50 = vector.load %arg11[%c0_38, %c0_39] : memref<128x1xf32, #tpu.memory_space<vmem>>, vector<128x1xf32>
      tpu.vector_store %arg11[%c0_38, %c0_39], %49 {strides = array<i32>} : memref<128x1xf32, #tpu.memory_space<vmem>>, vector<128x1xf32>,
      %cst_40 = arith.constant 0.000000e+00 : f32
      %51 = vector.broadcast %cst_40 : f32 to vector<128x64xf32>
      %c0_41 = arith.constant 0 : index
      %c0_42 = arith.constant 0 : index
      %52 = vector.load %arg12[%c0_41, %c0_42] : memref<128x64xf32, #tpu.memory_space<vmem>>, vector<128x64xf32>
      tpu.vector_store %arg12[%c0_41, %c0_42], %51 {strides = array<i32>} : memref<128x64xf32, #tpu.memory_space<vmem>>, vector<128x64xf32>,
    } else {
    }
    %c0 = arith.constant 0 : index
    %c0_1 = arith.constant 0 : index
    %c0_2 = arith.constant 0 : index
    %3 = vector.load %arg6[%c0, %c0_1, %c0_2] : memref<1x128x64xf32, #tpu.memory_space<vmem>>, vector<1x128x64xf32>
    %4 = vector.shape_cast %3 : vector<1x128x64xf32> to vector<128x64xf32>
    %c0_3 = arith.constant 0 : index
    %c0_4 = arith.constant 0 : index
    %c0_5 = arith.constant 0 : index
    %5 = vector.load %arg3[%c0_3, %c0_4, %c0_5] : memref<1x64x128xf32, #tpu.memory_space<vmem>>, vector<1x64x128xf32>
    %6 = vector.shape_cast %5 : vector<1x64x128xf32> to vector<64x128xf32>
    %cst = arith.constant dense<0.000000e+00> : vector<128x128xf32>
    %7 = tpu.matmul %4, %6, %cst {dimension_numbers = #tpu.dot_dimension_numbers<[1], [0], [0], [1], [0, 0, 1, 1], [], []>} : vector<128x64xf32>, vector<64x128xf32>, vector<128x128xf32> -> vector<128x128xf32>
    %c0_6 = arith.constant 0 : index
    %c0_7 = arith.constant 0 : index
    %c0_8 = arith.constant 0 : index
    %8 = vector.load %arg7[%c0_6, %c0_7, %c0_8] : memref<1x128x1xf32, #tpu.memory_space<vmem>>, vector<1x128x1xf32>
    %9 = vector.shape_cast %8 : vector<1x128x1xf32> to vector<128x1xf32>
    %10 = vector.broadcast %9 : vector<128x1xf32> to vector<128x128xf32>
    %11 = arith.subf %7, %10 : vector<128x128xf32>
    %c0_9 = arith.constant 0 : index
    %c0_10 = arith.constant 0 : index
    %c0_11 = arith.constant 0 : index
    %12 = vector.load %arg4[%c0_9, %c0_10, %c0_11] : memref<1x1x128xf32, #tpu.memory_space<vmem>>, vector<1x1x128xf32>
    %13 = vector.shape_cast %12 : vector<1x1x128xf32> to vector<1x128xf32>
    %14 = vector.broadcast %13 : vector<1x128xf32> to vector<128x128xf32>
    %15 = arith.mulf %11, %14 : vector<128x128xf32>
    %c0_12 = arith.constant 0 : index
    %c0_13 = arith.constant 0 : index
    %16 = vector.load %arg5[%c0_12, %c0_13] : memref<1x128xf32, #tpu.memory_space<vmem>>, vector<1x128xf32>
    %17 = vector.broadcast %16 : vector<1x128xf32> to vector<128x128xf32>
    %18 = arith.addf %15, %17 : vector<128x128xf32>
    %c0_14 = arith.constant 0 : index
    %c0_15 = arith.constant 0 : index
    %19 = vector.load %arg10[%c0_14, %c0_15] : memref<128x1xf32, #tpu.memory_space<vmem>>, vector<128x1xf32>
    %cst_16 = arith.constant dense<0xFF800000> : vector<128xf32>
    %20 = vector.multi_reduction <maximumf>, %18, %cst_16 [1] : vector<128x128xf32> to vector<128xf32>
    %21 = vector.shape_cast %20 : vector<128xf32> to vector<128x1xf32>
    %22 = arith.maximumf %19, %21 : vector<128x1xf32>
    %23 = arith.subf %19, %22 : vector<128x1xf32>
    %24 = math.exp %23 : vector<128x1xf32>
    %25 = vector.broadcast %22 : vector<128x1xf32> to vector<128x128xf32>
    %26 = arith.subf %18, %25 : vector<128x128xf32>
    %27 = math.exp %26 : vector<128x128xf32>
    %c0_17 = arith.constant 0 : index
    %c0_18 = arith.constant 0 : index
    %28 = vector.load %arg11[%c0_17, %c0_18] : memref<128x1xf32, #tpu.memory_space<vmem>>, vector<128x1xf32>
    %29 = arith.mulf %24, %28 : vector<128x1xf32>
    %cst_19 = arith.constant dense<0.000000e+00> : vector<128xf32>
    %30 = vector.multi_reduction <add>, %27, %cst_19 [1] : vector<128x128xf32> to vector<128xf32>
    %31 = vector.shape_cast %30 : vector<128xf32> to vector<128x1xf32>
    %32 = arith.addf %29, %31 : vector<128x1xf32>
    %c0_20 = arith.constant 0 : index
    %c0_21 = arith.constant 0 : index
    %33 = vector.load %arg11[%c0_20, %c0_21] : memref<128x1xf32, #tpu.memory_space<vmem>>, vector<128x1xf32>
    tpu.vector_store %arg11[%c0_20, %c0_21], %32 {strides = array<i32>} : memref<128x1xf32, #tpu.memory_space<vmem>>, vector<128x1xf32>,
    %c0_22 = arith.constant 0 : index
    %c0_23 = arith.constant 0 : index
    %34 = vector.load %arg12[%c0_22, %c0_23] : memref<128x64xf32, #tpu.memory_space<vmem>>, vector<128x64xf32>
    %35 = vector.broadcast %24 : vector<128x1xf32> to vector<128x64xf32>
    %36 = arith.mulf %35, %34 : vector<128x64xf32>
    %37 = arith.truncf %27 : vector<128x128xf32> to vector<128x128xbf16>
    %c0_24 = arith.constant 0 : index
    %c0_25 = arith.constant 0 : index
    %c0_26 = arith.constant 0 : index
    %38 = vector.load %arg8[%c0_24, %c0_25, %c0_26] : memref<1x128x64xbf16, #tpu.memory_space<vmem>>, vector<1x128x64xbf16>
    %39 = vector.shape_cast %38 : vector<1x128x64xbf16> to vector<128x64xbf16>
    %cst_27 = arith.constant dense<0.000000e+00> : vector<128x64xf32>
    %40 = tpu.matmul %37, %39, %cst_27 {dimension_numbers = #tpu.dot_dimension_numbers<[1], [0], [0], [1], [0, 0, 1, 1], [], []>} : vector<128x128xbf16>, vector<128x64xbf16>, vector<128x64xf32> -> vector<128x64xf32>
    %41 = arith.addf %36, %40 : vector<128x64xf32>
    %c0_28 = arith.constant 0 : index
    %c0_29 = arith.constant 0 : index
    %42 = vector.load %arg12[%c0_28, %c0_29] : memref<128x64xf32, #tpu.memory_space<vmem>>, vector<128x64xf32>
    tpu.vector_store %arg12[%c0_28, %c0_29], %41 {strides = array<i32>} : memref<128x64xf32, #tpu.memory_space<vmem>>, vector<128x64xf32>,
    %c0_30 = arith.constant 0 : index
    %c0_31 = arith.constant 0 : index
    %43 = vector.load %arg10[%c0_30, %c0_31] : memref<128x1xf32, #tpu.memory_space<vmem>>, vector<128x1xf32>
    tpu.vector_store %arg10[%c0_30, %c0_31], %22 {strides = array<i32>} : memref<128x1xf32, #tpu.memory_space<vmem>>, vector<128x1xf32>,
    %c0_i32_32 = arith.constant 0 : i32
    %44 = arith.cmpi eq, %arg2, %c0_i32_32 : i32
    %45 = arith.extui %44 : i1 to i32
    %c0_i32_33 = arith.constant 0 : i32
    %46 = arith.cmpi ne, %45, %c0_i32_33 : i32
    scf.if %46 {
      %c0_34 = arith.constant 0 : index
      %c0_35 = arith.constant 0 : index
      %47 = vector.load %arg11[%c0_34, %c0_35] : memref<128x1xf32, #tpu.memory_space<vmem>>, vector<128x1xf32>
      %48 = tpu.reciprocal %47 {approx = true} : vector<128x1xf32> -> vector<128x1xf32>
      %c0_36 = arith.constant 0 : index
      %c0_37 = arith.constant 0 : index
      %49 = vector.load %arg12[%c0_36, %c0_37] : memref<128x64xf32, #tpu.memory_space<vmem>>, vector<128x64xf32>
      %50 = vector.broadcast %48 : vector<128x1xf32> to vector<128x64xf32>
      %51 = arith.mulf %49, %50 : vector<128x64xf32>
      %52 = arith.truncf %51 : vector<128x64xf32> to vector<128x64xbf16>
      %c0_38 = arith.constant 0 : index
      %c0_39 = arith.constant 0 : index
      %c0_40 = arith.constant 0 : index
      %53 = vector.load %arg9[%c0_38, %c0_39, %c0_40] : memref<1x128x64xbf16, #tpu.memory_space<vmem>>, vector<1x128x64xbf16>
      %54 = vector.shape_cast %53 : vector<1x128x64xbf16> to vector<128x64xbf16>
      %55 = vector.shape_cast %52 : vector<128x64xbf16> to vector<1x128x64xbf16>
      tpu.vector_store %arg9[%c0_38, %c0_39, %c0_40], %55 {strides = array<i32>} : memref<1x128x64xbf16, #tpu.memory_space<vmem>>, vector<1x128x64xbf16>,
    } else {
    }
    return
  }
  func.func @transform_0(%arg0: i32, %arg1: i32, %arg2: i32) -> (i32, i32, i32) {
    %c0_i32 = arith.constant 0 : i32
    %c0_i32_0 = arith.constant 0 : i32
    return %arg0, %c0_i32, %arg2 : i32, i32, i32
  }
  func.func @transform_1(%arg0: i32, %arg1: i32, %arg2: i32) -> (i32, i32, i32) {
    %c0_i32 = arith.constant 0 : i32
    %c0_i32_0 = arith.constant 0 : i32
    return %arg0, %c0_i32, %arg2 : i32, i32, i32
  }
  func.func @transform_2(%arg0: i32, %arg1: i32, %arg2: i32) -> (i32, i32) {
    %c0_i32 = arith.constant 0 : i32
    %c0_i32_0 = arith.constant 0 : i32
    return %c0_i32, %arg2 : i32, i32
  }
  func.func @transform_3(%arg0: i32, %arg1: i32, %arg2: i32) -> (i32, i32, i32) {
    %c0_i32 = arith.constant 0 : i32
    %c0_i32_0 = arith.constant 0 : i32
    return %arg0, %arg1, %c0_i32 : i32, i32, i32
  }
  func.func @transform_4(%arg0: i32, %arg1: i32, %arg2: i32) -> (i32, i32, i32) {
    %c0_i32 = arith.constant 0 : i32
    %c0_i32_0 = arith.constant 0 : i32
    return %arg0, %arg1, %c0_i32 : i32, i32, i32
  }
  func.func @transform_5(%arg0: i32, %arg1: i32, %arg2: i32) -> (i32, i32, i32) {
    %c0_i32 = arith.constant 0 : i32
    %c0_i32_0 = arith.constant 0 : i32
    return %arg0, %arg2, %c0_i32 : i32, i32, i32
  }
  func.func @transform_6(%arg0: i32, %arg1: i32, %arg2: i32) -> (i32, i32, i32) {
    %c0_i32 = arith.constant 0 : i32
    %c0_i32_0 = arith.constant 0 : i32
    return %arg0, %arg1, %c0_i32 : i32, i32, i32
  }
}

</mosaic_0001>

<llo_original>
// kernel: tpu_custom_call.1
$region0: #{tpu_custom_call.1}
  #allocation0 [shape = 'u32[]', space=smem, size = 0x4, offset = 0x4, fixed_abs, tag = 'smem constant byte address 0x4 - core index']
  #allocation1 [shape = 'u32[72,128]{1,0:T(1,128)}', space=vmem, size = 0x9000, scoped, tag = 'internal scratch']
  #allocation2 [shape = 'f32[128,1]{1,0:T(8,128)}', space=vmem, size = 0x10000, scoped, tag = 'scratch operand']
  #allocation3 [shape = 'f32[128,1]{1,0:T(8,128)}', space=vmem, size = 0x10000, scoped, tag = 'scratch operand']
  #allocation4 [shape = 'f32[128,64]{1,0:T(8,128)}', space=vmem, size = 0x10000, scoped, tag = 'scratch operand']
  %s0 = inlined_call_operand.vmem [shape: f32[2,64,128], index: 0, kind: input, shape index: {}]
  %s1 = inlined_call_operand.vmem [shape: f32[2,1,128], index: 1, kind: input, shape index: {}]
  %s2 = inlined_call_operand.vmem [shape: f32[1,128], index: 2, kind: input, shape index: {}]
  %s3 = inlined_call_operand.vmem [shape: f32[2,128,64], index: 3, kind: input, shape index: {}]
  %s4 = inlined_call_operand.vmem [shape: f32[2,128,1], index: 4, kind: input, shape index: {}]
  %s5 = inlined_call_operand.vmem [shape: bf16[2,128,64], index: 5, kind: input, shape index: {}]
  %s6 = inlined_call_operand.vmem [shape: bf16[2,128,64], index: 6, kind: output, shape index: {}]
  %s7 = sld [smem:[#allocation0]]
  $region65: #{tpu_custom_call.1} parent=0
    _
  %s9 = ssub.s32 1, %s7
  %s10 = scalar_select 0, %s9, %s7
  loop: start=0, step=1, limit=4
  $region2: #{tpu_custom_call.1} parent=0 // loop_pre_header
    _
  $region3: #{tpu_custom_call.1} parent=0 // loop_header
    %s12 = sphi 0, %s16
    %p13 = scmp.ge.s32.totalorder %s12, 4
    %s19 = sphi 0, %s38
    %s20 = sphi 0, %s34
    %s21 = sphi 0, %s30
    %s22 = sphi 0, %s19
    %s23 = sphi 0, %s20
    %s24 = sphi 0, %s21
    %s25 = sphi 0, %s22
    %s26 = sphi 0, %s23
    %s27 = sphi 0, %s24
    %s43 = sphi 0, %s45
    %s46 = sphi 0, %s43
    %s47 = sphi 0, %s46
    %s63 = sphi 0, %s47
    %s71 = sphi 0, %s73
    %s74 = sphi 0, %s71
    %s75 = sphi 0, %s74
    %s91 = sphi 0, %s75
    %s97 = sphi 0, %s99
    %s100 = sphi 0, %s97
    %s101 = sphi 0, %s100
    %s117 = sphi 0, %s101
    %s125 = sphi 0, %s127
    %s128 = sphi 0, %s125
    %s129 = sphi 0, %s128
    %s145 = sphi 0, %s129
    %s153 = sphi 0, %s155
    %s156 = sphi 0, %s153
    %s157 = sphi 0, %s156
    %s173 = sphi 0, %s157
    %s181 = sphi 0, %s183
    %s184 = sphi 0, %s181
    %s185 = sphi 0, %s184
    %s201 = sphi 0, %s185
    %s209 = sphi 0, %s211
    %s212 = sphi 0, %s209
    %s213 = sphi 0, %s212
    %s229 = sphi 0, %s213
  $region4: #{tpu_custom_call.1} parent=0 // loop_header_branch
    %15 = sbr.rel (%p13) target = $region8
  $region5: #{tpu_custom_call.1} parent=0 // loop_body
    %s17 = ssub.s32 %s12, 1
    %s18 = ssub.s32 %s12, 2
    %s28 = sadd.s32 1, %s21
    %p29 = scmp.ge.s32.totalorder %s28, 1
    %s30 = scalar_select %p29, 0, %s28
    %s31 = sadd.s32 1, %s20
    %s32 = scalar_select %p29, %s31, %s20
    %p33 = scmp.ge.s32.totalorder %s32, 1
    %s34 = scalar_select %p33, 0, %s32
    %s35 = sadd.s32 1, %s19
    %s36 = scalar_select %p33, %s35, %s19
    %p37 = scmp.ge.s32.totalorder %s36, 2
    %s38 = scalar_select %p37, 0, %s36
    %s39 = ssub.s32 %s19, %s38
    %s40 = ssub.s32 %s21, %s30
    %s41 = sor.u32 %s39, %s40
    %p42 = scmp.eq.s32.totalorder %s41, 0
    %s44 = sadd.s32 %s43, 1
    %s45 = scalar_select %p42, %s43, %s44
    %p48 = pneg %p42
    %p49 = scmp.eq.s32.totalorder %s12, 1
    %p50 = por %p48, %p49
    %p51 = scmp.ne.s32.totalorder %s43, %s46
    %p52 = scmp.eq.s32.totalorder %s12, 0
    %p53 = por %p51, %p52
    %p54 = scmp.ne.s32.totalorder %s43, %s46
    %p55 = scmp.eq.s32.totalorder %s17, 1
    %p56 = por %p54, %p55
    %p57 = scmp.ne.s32.totalorder %s46, %s47
    %p58 = scmp.eq.s32.totalorder %s17, 0
    %p59 = por %p57, %p58
    %p60 = scmp.ne.s32.totalorder %s46, %s47
    %p61 = scmp.eq.s32.totalorder %s18, 1
    %p62 = por %p60, %p61
    %p64 = scmp.ne.s32.totalorder %s47, %s63
    %p65 = scmp.eq.s32.totalorder %s18, 0
    %p66 = por %p64, %p65
    %s67 = ssub.s32 %s19, %s38
    %s68 = ssub.s32 %s21, %s30
    %s69 = sor.u32 %s67, %s68
    %p70 = scmp.eq.s32.totalorder %s69, 0
    %s72 = sadd.s32 %s71, 1
    %s73 = scalar_select %p70, %s71, %s72
    %p76 = pneg %p70
    %p77 = scmp.eq.s32.totalorder %s12, 1
    %p78 = por %p76, %p77
    %p79 = scmp.ne.s32.totalorder %s71, %s74
    %p80 = scmp.eq.s32.totalorder %s12, 0
    %p81 = por %p79, %p80
    %p82 = scmp.ne.s32.totalorder %s71, %s74
    %p83 = scmp.eq.s32.totalorder %s17, 1
    %p84 = por %p82, %p83
    %p85 = scmp.ne.s32.totalorder %s74, %s75
    %p86 = scmp.eq.s32.totalorder %s17, 0
    %p87 = por %p85, %p86
    %p88 = scmp.ne.s32.totalorder %s74, %s75
    %p89 = scmp.eq.s32.totalorder %s18, 1
    %p90 = por %p88, %p89
    %p92 = scmp.ne.s32.totalorder %s75, %s91
    %p93 = scmp.eq.s32.totalorder %s18, 0
    %p94 = por %p92, %p93
    %s95 = ssub.s32 %s21, %s30
    %p96 = scmp.eq.s32.totalorder %s95, 0
    %s98 = sadd.s32 %s97, 1
    %s99 = scalar_select %p96, %s97, %s98
    %p102 = pneg %p96
    %p103 = scmp.eq.s32.totalorder %s12, 1
    %p104 = por %p102, %p103
    %p105 = scmp.ne.s32.totalorder %s97, %s100
    %p106 = scmp.eq.s32.totalorder %s12, 0
    %p107 = por %p105, %p106
    %p108 = scmp.ne.s32.totalorder %s97, %s100
    %p109 = scmp.eq.s32.totalorder %s17, 1
    %p110 = por %p108, %p109
    %p111 = scmp.ne.s32.totalorder %s100, %s101
    %p112 = scmp.eq.s32.totalorder %s17, 0
    %p113 = por %p111, %p112
    %p114 = scmp.ne.s32.totalorder %s100, %s101
    %p115 = scmp.eq.s32.totalorder %s18, 1
    %p116 = por %p114, %p115
    %p118 = scmp.ne.s32.totalorder %s101, %s117
    %p119 = scmp.eq.s32.totalorder %s18, 0
    %p120 = por %p118, %p119
    %s121 = ssub.s32 %s19, %s38
    %s122 = ssub.s32 %s20, %s34
    %s123 = sor.u32 %s121, %s122
    %p124 = scmp.eq.s32.totalorder %s123, 0
    %s126 = sadd.s32 %s125, 1
    %s127 = scalar_select %p124, %s125, %s126
    %p130 = pneg %p124
    %p131 = scmp.eq.s32.totalorder %s12, 1
    %p132 = por %p130, %p131
    %p133 = scmp.ne.s32.totalorder %s125, %s128
    %p134 = scmp.eq.s32.totalorder %s12, 0
    %p135 = por %p133, %p134
    %p136 = scmp.ne.s32.totalorder %s125, %s128
    %p137 = scmp.eq.s32.totalorder %s17, 1
    %p138 = por %p136, %p137
    %p139 = scmp.ne.s32.totalorder %s128, %s129
    %p140 = scmp.eq.s32.totalorder %s17, 0
    %p141 = por %p139, %p140
    %p142 = scmp.ne.s32.totalorder %s128, %s129
    %p143 = scmp.eq.s32.totalorder %s18, 1
    %p144 = por %p142, %p143
    %p146 = scmp.ne.s32.totalorder %s129, %s145
    %p147 = scmp.eq.s32.totalorder %s18, 0
    %p148 = por %p146, %p147
    %s149 = ssub.s32 %s19, %s38
    %s150 = ssub.s32 %s20, %s34
    %s151 = sor.u32 %s149, %s150
    %p152 = scmp.eq.s32.totalorder %s151, 0
    %s154 = sadd.s32 %s153, 1
    %s155 = scalar_select %p152, %s153, %s154
    %p158 = pneg %p152
    %p159 = scmp.eq.s32.totalorder %s12, 1
    %p160 = por %p158, %p159
    %p161 = scmp.ne.s32.totalorder %s153, %s156
    %p162 = scmp.eq.s32.totalorder %s12, 0
    %p163 = por %p161, %p162
    %p164 = scmp.ne.s32.totalorder %s153, %s156
    %p165 = scmp.eq.s32.totalorder %s17, 1
    %p166 = por %p164, %p165
    %p167 = scmp.ne.s32.totalorder %s156, %s157
    %p168 = scmp.eq.s32.totalorder %s17, 0
    %p169 = por %p167, %p168
    %p170 = scmp.ne.s32.totalorder %s156, %s157
    %p171 = scmp.eq.s32.totalorder %s18, 1
    %p172 = por %p170, %p171
    %p174 = scmp.ne.s32.totalorder %s157, %s173
    %p175 = scmp.eq.s32.totalorder %s18, 0
    %p176 = por %p174, %p175
    %s177 = ssub.s32 %s19, %s38
    %s178 = ssub.s32 %s21, %s30
    %s179 = sor.u32 %s177, %s178
    %p180 = scmp.eq.s32.totalorder %s179, 0
    %s182 = sadd.s32 %s181, 1
    %s183 = scalar_select %p180, %s181, %s182
    %p186 = pneg %p180
    %p187 = scmp.eq.s32.totalorder %s12, 1
    %p188 = por %p186, %p187
    %p189 = scmp.ne.s32.totalorder %s181, %s184
    %p190 = scmp.eq.s32.totalorder %s12, 0
    %p191 = por %p189, %p190
    %p192 = scmp.ne.s32.totalorder %s181, %s184
    %p193 = scmp.eq.s32.totalorder %s17, 1
    %p194 = por %p192, %p193
    %p195 = scmp.ne.s32.totalorder %s184, %s185
    %p196 = scmp.eq.s32.totalorder %s17, 0
    %p197 = por %p195, %p196
    %p198 = scmp.ne.s32.totalorder %s184, %s185
    %p199 = scmp.eq.s32.totalorder %s18, 1
    %p200 = por %p198, %p199
    %p202 = scmp.ne.s32.totalorder %s185, %s201
    %p203 = scmp.eq.s32.totalorder %s18, 0
    %p204 = por %p202, %p203
    %s205 = ssub.s32 %s19, %s38
    %s206 = ssub.s32 %s20, %s34
    %s207 = sor.u32 %s205, %s206
    %p208 = scmp.eq.s32.totalorder %s207, 0
    %s210 = sadd.s32 %s209, 1
    %s211 = scalar_select %p208, %s209, %s210
    %p214 = pneg %p208
    %p215 = scmp.eq.s32.totalorder %s12, 1
    %p216 = por %p214, %p215
    %p217 = scmp.ne.s32.totalorder %s209, %s212
    %p218 = scmp.eq.s32.totalorder %s12, 0
    %p219 = por %p217, %p218
    %p220 = scmp.ne.s32.totalorder %s209, %s212
    %p221 = scmp.eq.s32.totalorder %s17, 1
    %p222 = por %p220, %p221
    %p223 = scmp.ne.s32.totalorder %s212, %s213
    %p224 = scmp.eq.s32.totalorder %s17, 0
    %p225 = por %p223, %p224
    %p226 = scmp.ne.s32.totalorder %s212, %s213
    %p227 = scmp.eq.s32.totalorder %s18, 1
    %p228 = por %p226, %p227
    %p230 = scmp.ne.s32.totalorder %s213, %s229
    %p231 = scmp.eq.s32.totalorder %s18, 0
    %p232 = por %p230, %p231
    %p233 = scmp.le.s32.totalorder 1, %s12
    %p234 = scmp.lt.s32.totalorder %s12, 3
    %p235 = pnand %p233, %p234
    %p236 = pneg %p235
    // Predicated region
    $region9: #{tpu_custom_call.1} parent=5 // pred_check
      _
    $region10: #{tpu_custom_call.1} parent=5 // pred_check_branch
      %238 = sbr.rel (%p235) target = $region12
    $region11: #{tpu_custom_call.1} parent=5 // pred_region
      %s239 = ssub.s32 %s12, 1
      // Predicated region
      $region13: #{tpu_custom_call.1} parent=11 // pred_check
        %p240 = pneg %p113
      $region14: #{tpu_custom_call.1} parent=11 // pred_check_branch
        %242 = sbr.rel (%p240) target = $region16
      $region15: #{tpu_custom_call.1} parent=11 // pred_region
        %p243 = scmp.lt.s32.totalorder %s24, 0
        %s244 = scalar_select %p243, %s24, 0
        %s245 = scalar_lea.vmem %s2, %s244
      $region16: #{tpu_custom_call.1} parent=11 // pred_fallthru
        _
    $region12: #{tpu_custom_call.1} parent=5 // pred_fallthru
      _
    %p246 = scmp.lt.s32.totalorder %s12, 2
    // Predicated region
    $region17: #{tpu_custom_call.1} parent=5 // pred_check
      %p247 = pneg %p246
    $region18: #{tpu_custom_call.1} parent=5 // pred_check_branch
      %249 = sbr.rel (%p247) target = $region20
    $region19: #{tpu_custom_call.1} parent=5 // pred_region
      // Predicated region
      $region21: #{tpu_custom_call.1} parent=19 // pred_check
        %p250 = pneg %p53
      $region22: #{tpu_custom_call.1} parent=19 // pred_check_branch
        %252 = sbr.rel (%p250) target = $region24
      $region23: #{tpu_custom_call.1} parent=19 // pred_region
        %p253 = scmp.lt.s32.totalorder %s19, 1
        %s254 = scalar_select %p253, %s19, 1
        %p255 = scmp.lt.s32.totalorder %s21, 0
        %s256 = scalar_select %p255, %s21, 0
        %s257 = smul.addr %s254, 8
        %s258 = sadd.s32 %s256, %s257
        %s259 = smul.addr %s258, 8
        %s260 = scalar_lea.vmem %s0, %s259
      $region24: #{tpu_custom_call.1} parent=19 // pred_fallthru
        _
      // Predicated region
      $region25: #{tpu_custom_call.1} parent=19 // pred_check
        %p261 = pneg %p81
      $region26: #{tpu_custom_call.1} parent=19 // pred_check_branch
        %263 = sbr.rel (%p261) target = $region28
      $region27: #{tpu_custom_call.1} parent=19 // pred_region
        %p264 = scmp.lt.s32.totalorder %s19, 1
        %s265 = scalar_select %p264, %s19, 1
        %p266 = scmp.lt.s32.totalorder %s21, 0
        %s267 = scalar_select %p266, %s21, 0
        %s268 = sadd.s32 %s267, %s265
        %s269 = scalar_lea.vmem %s1, %s268
      $region28: #{tpu_custom_call.1} parent=19 // pred_fallthru
        _
      // Predicated region
      $region29: #{tpu_custom_call.1} parent=19 // pred_check
        %p270 = pneg %p135
      $region30: #{tpu_custom_call.1} parent=19 // pred_check_branch
        %272 = sbr.rel (%p270) target = $region32
      $region31: #{tpu_custom_call.1} parent=19 // pred_region
        %s273 = smul.u32 16, %s20
        %p274 = scmp.lt.s32.totalorder %s19, 1
        %s275 = scalar_select %p274, %s19, 1
        %p276 = scmp.lt.s32.totalorder %s273, 15
        %s277 = scalar_select %p276, %s273, 15
        %s278 = smul.addr %s275, 16
        %s279 = sadd.s32 %s277, %s278
        %s280 = smul.addr %s279, 8
        %s281 = scalar_lea.vmem %s3, %s280
        %s282 = smul.u32 16, %s20
      $region32: #{tpu_custom_call.1} parent=19 // pred_fallthru
        _
      // Predicated region
      $region33: #{tpu_custom_call.1} parent=19 // pred_check
        %p283 = pneg %p163
      $region34: #{tpu_custom_call.1} parent=19 // pred_check_branch
        %285 = sbr.rel (%p283) target = $region36
      $region35: #{tpu_custom_call.1} parent=19 // pred_region
        %s286 = smul.u32 16, %s20
        %p287 = scmp.lt.s32.totalorder %s19, 1
        %s288 = scalar_select %p287, %s19, 1
        %p289 = scmp.lt.s32.totalorder %s286, 15
        %s290 = scalar_select %p289, %s286, 15
        %s291 = smul.addr %s288, 16
        %s292 = sadd.s32 %s290, %s291
        %s293 = smul.addr %s292, 8
        %s294 = scalar_lea.vmem %s4, %s293
        %s295 = smul.u32 16, %s20
      $region36: #{tpu_custom_call.1} parent=19 // pred_fallthru
        _
      // Predicated region
      $region37: #{tpu_custom_call.1} parent=19 // pred_check
        %p296 = pneg %p191
      $region38: #{tpu_custom_call.1} parent=19 // pred_check_branch
        %298 = sbr.rel (%p296) target = $region40
      $region39: #{tpu_custom_call.1} parent=19 // pred_region
        %s299 = smul.u32 16, %s21
        %p300 = scmp.lt.s32.totalorder %s19, 1
        %s301 = scalar_select %p300, %s19, 1
        %p302 = scmp.lt.s32.totalorder %s299, 15
        %s303 = scalar_select %p302, %s299, 15
        %s304 = smul.addr %s301, 16
        %s305 = sadd.s32 %s303, %s304
        %s306 = smul.addr %s305, 4
        %s307 = scalar_lea.vmem %s5, %s306
        %s308 = smul.u32 16, %s21
      $region40: #{tpu_custom_call.1} parent=19 // pred_fallthru
        _
    $region20: #{tpu_custom_call.1} parent=5 // pred_fallthru
      _
    %p309 = scmp.le.s32.totalorder 1, %s12
    %p310 = scmp.lt.s32.totalorder %s12, 3
    %p311 = pnand %p309, %p310
    %p312 = pneg %p311
    // Predicated region
    $region41: #{tpu_custom_call.1} parent=5 // pred_check
      _
    $region42: #{tpu_custom_call.1} parent=5 // pred_check_branch
      %314 = sbr.rel (%p311) target = $region44
    $region43: #{tpu_custom_call.1} parent=5 // pred_region
      %s315 = ssub.s32 %s12, 1
      %p316 = scmp.lt.s32.totalorder %s22, 1
      %s317 = scalar_select %p316, %s22, 1
      %p318 = scmp.lt.s32.totalorder %s24, 0
      %s319 = scalar_select %p318, %s24, 0
      %s320 = smul.addr %s317, 8
      %s321 = sadd.s32 %s319, %s320
      %s322 = smul.addr %s321, 8
      %s323 = scalar_lea.vmem %s0, %s322
      %p324 = pneg %p59
      %p325 = pneg %p56
      %p326 = scmp.lt.s32.totalorder %s22, 1
      %s327 = scalar_select %p326, %s22, 1
      %p328 = scmp.lt.s32.totalorder %s24, 0
      %s329 = scalar_select %p328, %s24, 0
      %s330 = sadd.s32 %s329, %s327
      %s331 = scalar_lea.vmem %s1, %s330
      %p332 = pneg %p87
      %p333 = pneg %p84
      %p334 = scmp.lt.s32.totalorder %s24, 0
      %s335 = scalar_select %p334, %s24, 0
      %s336 = scalar_lea.vmem %s2, %s335
      %p337 = pneg %p113
      %p338 = pneg %p110
      %s339 = smul.u32 16, %s23
      %p340 = scmp.lt.s32.totalorder %s22, 1
      %s341 = scalar_select %p340, %s22, 1
      %p342 = scmp.lt.s32.totalorder %s339, 15
      %s343 = scalar_select %p342, %s339, 15
      %s344 = smul.addr %s341, 16
      %s345 = sadd.s32 %s343, %s344
      %s346 = smul.addr %s345, 8
      %s347 = scalar_lea.vmem %s3, %s346
      %p348 = pneg %p141
      %p349 = pneg %p138
      %s350 = smul.u32 16, %s23
      %p351 = scmp.lt.s32.totalorder %s22, 1
      %s352 = scalar_select %p351, %s22, 1
      %p353 = scmp.lt.s32.totalorder %s350, 15
      %s354 = scalar_select %p353, %s350, 15
      %s355 = smul.addr %s352, 16
      %s356 = sadd.s32 %s354, %s355
      %s357 = smul.addr %s356, 8
      %s358 = scalar_lea.vmem %s4, %s357
      %p359 = pneg %p169
      %p360 = pneg %p166
      %s361 = smul.u32 16, %s24
      %p362 = scmp.lt.s32.totalorder %s22, 1
      %s363 = scalar_select %p362, %s22, 1
      %p364 = scmp.lt.s32.totalorder %s361, 15
      %s365 = scalar_select %p364, %s361, 15
      %s366 = smul.addr %s363, 16
      %s367 = sadd.s32 %s365, %s366
      %s368 = smul.addr %s367, 4
      %s369 = scalar_lea.vmem %s5, %s368
      %p370 = pneg %p197
      %p371 = pneg %p194
      %p372 = pneg %p225
      %p373 = pneg %p222
      %s374 = smul.u32 16, %s23
      %p375 = scmp.lt.s32.totalorder %s22, 1
      %s376 = scalar_select %p375, %s22, 1
      %p377 = scmp.lt.s32.totalorder %s374, 15
      %s378 = scalar_select %p377, %s374, 15
      %s379 = smul.addr %s376, 16
      %s380 = sadd.s32 %s378, %s379
      %s381 = smul.addr %s380, 4
      %s382 = scalar_lea.vmem %s6, %s381
      %p383 = scmp.lt.s32.totalorder %s22, 1
      %s384 = scalar_select %p383, %s22, 1
      %p385 = scmp.lt.s32.totalorder %s24, 0
      %s386 = scalar_select %p385, %s24, 0
      %s387 = smul.addr %s384, 8
      %s388 = sadd.s32 %s386, %s387
      %s389 = smul.addr %s388, 8
      %s390 = scalar_lea.vmem %s0, %s389
      %p391 = scmp.lt.s32.totalorder %s22, 1
      %s392 = scalar_select %p391, %s22, 1
      %p393 = scmp.lt.s32.totalorder %s24, 0
      %s394 = scalar_select %p393, %s24, 0
      %s395 = sadd.s32 %s394, %s392
      %s396 = scalar_lea.vmem %s1, %s395
      %p397 = scmp.lt.s32.totalorder %s24, 0
      %s398 = scalar_select %p397, %s24, 0
      %s399 = scalar_lea.vmem %s2, %s398
      %s400 = smul.u32 16, %s23
      %p401 = scmp.lt.s32.totalorder %s22, 1
      %s402 = scalar_select %p401, %s22, 1
      %p403 = scmp.lt.s32.totalorder %s400, 15
      %s404 = scalar_select %p403, %s400, 15
      %s405 = smul.addr %s402, 16
      %s406 = sadd.s32 %s404, %s405
      %s407 = smul.addr %s406, 8
      %s408 = scalar_lea.vmem %s3, %s407
      %s409 = smul.u32 16, %s23
      %s410 = smul.u32 16, %s23
      %p411 = scmp.lt.s32.totalorder %s22, 1
      %s412 = scalar_select %p411, %s22, 1
      %p413 = scmp.lt.s32.totalorder %s410, 15
      %s414 = scalar_select %p413, %s410, 15
      %s415 = smul.addr %s412, 16
      %s416 = sadd.s32 %s414, %s415
      %s417 = smul.addr %s416, 8
      %s418 = scalar_lea.vmem %s4, %s417
      %s419 = smul.u32 16, %s23
      %s420 = smul.u32 16, %s24
      %p421 = scmp.lt.s32.totalorder %s22, 1
      %s422 = scalar_select %p421, %s22, 1
      %p423 = scmp.lt.s32.totalorder %s420, 15
      %s424 = scalar_select %p423, %s420, 15
      %s425 = smul.addr %s422, 16
      %s426 = sadd.s32 %s424, %s425
      %s427 = smul.addr %s426, 4
      %s428 = scalar_lea.vmem %s5, %s427
      %s429 = smul.u32 16, %s24
      %s430 = smul.u32 16, %s23
      %p431 = scmp.lt.s32.totalorder %s22, 1
      %s432 = scalar_select %p431, %s22, 1
      %p433 = scmp.lt.s32.totalorder %s430, 15
      %s434 = scalar_select %p433, %s430, 15
      %s435 = smul.addr %s432, 16
      %s436 = sadd.s32 %s434, %s435
      %s437 = smul.addr %s436, 4
      %s438 = scalar_lea.vmem %s6, %s437
      %s439 = smul.u32 16, %s23
      %p440 = scmp.eq.s32.totalorder %s24, 0
      // Predicated region
      $region45: #{tpu_custom_call.1} parent=43 // pred_check
        %p441 = pneg %p440
      $region46: #{tpu_custom_call.1} parent=43 // pred_check_branch
        %443 = sbr.rel (%p441) target = $region48
      $region47: #{tpu_custom_call.1} parent=43 // pred_region
        %vm444 = vcmask 7168
        %445 = vst.msk [vmem:[#allocation2] sm:$0xff] %vm444, -inf
        %446 = vst.msk [vmem:[#allocation2 + $0x8] sm:$0xff] %vm444, -inf
        %447 = vst.msk [vmem:[#allocation2 + $0x10] sm:$0xff] %vm444, -inf
        %448 = vst.msk [vmem:[#allocation2 + $0x18] sm:$0xff] %vm444, -inf
        %449 = vst.msk [vmem:[#allocation2 + $0x20] sm:$0xff] %vm444, -inf
        %450 = vst.msk [vmem:[#allocation2 + $0x28] sm:$0xff] %vm444, -inf
        %451 = vst.msk [vmem:[#allocation2 + $0x30] sm:$0xff] %vm444, -inf
        %452 = vst.msk [vmem:[#allocation2 + $0x38] sm:$0xff] %vm444, -inf
        %453 = vst.msk [vmem:[#allocation2 + $0x40] sm:$0xff] %vm444, -inf
        %454 = vst.msk [vmem:[#allocation2 + $0x48] sm:$0xff] %vm444, -inf
        %455 = vst.msk [vmem:[#allocation2 + $0x50] sm:$0xff] %vm444, -inf
        %456 = vst.msk [vmem:[#allocation2 + $0x58] sm:$0xff] %vm444, -inf
        %457 = vst.msk [vmem:[#allocation2 + $0x60] sm:$0xff] %vm444, -inf
        %458 = vst.msk [vmem:[#allocation2 + $0x68] sm:$0xff] %vm444, -inf
        %459 = vst.msk [vmem:[#allocation2 + $0x70] sm:$0xff] %vm444, -inf
        %460 = vst.msk [vmem:[#allocation2 + $0x78] sm:$0xff] %vm444, -inf
        %461 = vst.msk [vmem:[#allocation3] sm:$0xff] %vm444, 0.0
        %462 = vst.msk [vmem:[#allocation3 + $0x8] sm:$0xff] %vm444, 0.0
        %463 = vst.msk [vmem:[#allocation3 + $0x10] sm:$0xff] %vm444, 0.0
        %464 = vst.msk [vmem:[#allocation3 + $0x18] sm:$0xff] %vm444, 0.0
        %465 = vst.msk [vmem:[#allocation3 + $0x20] sm:$0xff] %vm444, 0.0
        %466 = vst.msk [vmem:[#allocation3 + $0x28] sm:$0xff] %vm444, 0.0
        %467 = vst.msk [vmem:[#allocation3 + $0x30] sm:$0xff] %vm444, 0.0
        %468 = vst.msk [vmem:[#allocation3 + $0x38] sm:$0xff] %vm444, 0.0
        %469 = vst.msk [vmem:[#allocation3 + $0x40] sm:$0xff] %vm444, 0.0
        %470 = vst.msk [vmem:[#allocation3 + $0x48] sm:$0xff] %vm444, 0.0
        %471 = vst.msk [vmem:[#allocation3 + $0x50] sm:$0xff] %vm444, 0.0
        %472 = vst.msk [vmem:[#allocation3 + $0x58] sm:$0xff] %vm444, 0.0
        %473 = vst.msk [vmem:[#allocation3 + $0x60] sm:$0xff] %vm444, 0.0
        %474 = vst.msk [vmem:[#allocation3 + $0x68] sm:$0xff] %vm444, 0.0
        %475 = vst.msk [vmem:[#allocation3 + $0x70] sm:$0xff] %vm444, 0.0
        %476 = vst.msk [vmem:[#allocation3 + $0x78] sm:$0xff] %vm444, 0.0
        %vm477 = vcmask 523264
        %478 = vst.msk [vmem:[#allocation4] sm:$0xff] %vm477, 0.0
        %479 = vst.msk [vmem:[#allocation4 + $0x8] sm:$0xff] %vm477, 0.0
        %480 = vst.msk [vmem:[#allocation4 + $0x10] sm:$0xff] %vm477, 0.0
        %481 = vst.msk [vmem:[#allocation4 + $0x18] sm:$0xff] %vm477, 0.0
        %482 = vst.msk [vmem:[#allocation4 + $0x20] sm:$0xff] %vm477, 0.0
        %483 = vst.msk [vmem:[#allocation4 + $0x28] sm:$0xff] %vm477, 0.0
        %484 = vst.msk [vmem:[#allocation4 + $0x30] sm:$0xff] %vm477, 0.0
        %485 = vst.msk [vmem:[#allocation4 + $0x38] sm:$0xff] %vm477, 0.0
        %486 = vst.msk [vmem:[#allocation4 + $0x40] sm:$0xff] %vm477, 0.0
        %487 = vst.msk [vmem:[#allocation4 + $0x48] sm:$0xff] %vm477, 0.0
        %488 = vst.msk [vmem:[#allocation4 + $0x50] sm:$0xff] %vm477, 0.0
        %489 = vst.msk [vmem:[#allocation4 + $0x58] sm:$0xff] %vm477, 0.0
        %490 = vst.msk [vmem:[#allocation4 + $0x60] sm:$0xff] %vm477, 0.0
        %491 = vst.msk [vmem:[#allocation4 + $0x68] sm:$0xff] %vm477, 0.0
        %492 = vst.msk [vmem:[#allocation4 + $0x70] sm:$0xff] %vm477, 0.0
        %493 = vst.msk [vmem:[#allocation4 + $0x78] sm:$0xff] %vm477, 0.0
      $region48: #{tpu_custom_call.1} parent=43 // pred_fallthru
        _
      %v494 = vld [vmem:[%s408] sm:$0xff]
      %v495 = vld [vmem:[%s408 + $0x8] sm:$0xff]
      %v496 = vld [vmem:[%s408 + $0x10] sm:$0xff]
      %v497 = vld [vmem:[%s408 + $0x18] sm:$0xff]
      %v498 = vld [vmem:[%s408 + $0x20] sm:$0xff]
      %v499 = vld [vmem:[%s408 + $0x28] sm:$0xff]
      %v500 = vld [vmem:[%s408 + $0x30] sm:$0xff]
      %v501 = vld [vmem:[%s408 + $0x38] sm:$0xff]
      %v502 = vld [vmem:[%s408 + $0x40] sm:$0xff]
      %v503 = vld [vmem:[%s408 + $0x48] sm:$0xff]
      %v504 = vld [vmem:[%s408 + $0x50] sm:$0xff]
      %v505 = vld [vmem:[%s408 + $0x58] sm:$0xff]
      %v506 = vld [vmem:[%s408 + $0x60] sm:$0xff]
      %v507 = vld [vmem:[%s408 + $0x68] sm:$0xff]
      %v508 = vld [vmem:[%s408 + $0x70] sm:$0xff]
      %v509 = vld [vmem:[%s408 + $0x78] sm:$0xff]
      %v510 = vld [vmem:[%s390] sm:$0xff]
      %v511 = vld [vmem:[%s390 + $0x8] sm:$0xff]
      %v512 = vld [vmem:[%s390 + $0x10] sm:$0xff]
      %v513 = vld [vmem:[%s390 + $0x18] sm:$0xff]
      %v514 = vld [vmem:[%s390 + $0x20] sm:$0xff]
      %v515 = vld [vmem:[%s390 + $0x28] sm:$0xff]
      %v516 = vld [vmem:[%s390 + $0x30] sm:$0xff]
      %v517 = vld [vmem:[%s390 + $0x38] sm:$0xff]
      %vm518 = vcmask 523264
      %v520 = vsel %vm518, %v494, 0
      %v523 = vsel %vm518, %v495, 0
      %v526 = vsel %vm518, %v496, 0
      %v529 = vsel %vm518, %v497, 0
      %v532 = vsel %vm518, %v498, 0
      %v535 = vsel %vm518, %v499, 0
      %v538 = vsel %vm518, %v500, 0
      %v541 = vsel %vm518, %v501, 0
      %v544 = vsel %vm518, %v502, 0
      %v547 = vsel %vm518, %v503, 0
      %v550 = vsel %vm518, %v504, 0
      %v553 = vsel %vm518, %v505, 0
      %v556 = vsel %vm518, %v506, 0
      %v559 = vsel %vm518, %v507, 0
      %v562 = vsel %vm518, %v508, 0
      %v565 = vsel %vm518, %v509, 0
      %567 = vmatpush.msra.mxu0 0.0
      %568 = vmatpush.msra.mxu0 0.0
      %569 = vmatpush.msra.mxu0 0.0
      %570 = vmatpush.msra.mxu0 0.0
      %571 = vmatpush.msra.mxu0 0.0
      %572 = vmatpush.msra.mxu0 0.0
      %573 = vmatpush.msra.mxu0 0.0
      %574 = vmatpush.msra.mxu0 0.0
      %575 = vmatpush.msra.mxu0 %v517
      %576 = vmatpush.msra.mxu0 %v516
      %577 = vmatpush.msra.mxu0 %v515
      %578 = vmatpush.msra.mxu0 %v514
      %579 = vmatpush.msra.mxu0 %v513
      %580 = vmatpush.msra.mxu0 %v512
      %581 = vmatpush.msra.mxu0 %v511
      %582 = vmatpush.msra.mxu0 %v510
      %583 = vmatmul.f32.gmra.mxu0 %v520
      %v584 = vpop.f32.mrf.mxu0
      %v585 = vadd.f32 0.0, %v584
      %586 = vmatmul.f32.gmra.mxu0 %v523
      %v587 = vpop.f32.mrf.mxu0
      %v588 = vadd.f32 0.0, %v587
      %589 = vmatmul.f32.gmra.mxu0 %v526
      %v590 = vpop.f32.mrf.mxu0
      %v591 = vadd.f32 0.0, %v590
      %592 = vmatmul.f32.gmra.mxu0 %v529
      %v593 = vpop.f32.mrf.mxu0
      %v594 = vadd.f32 0.0, %v593
      %595 = vmatmul.f32.gmra.mxu0 %v532
      %v596 = vpop.f32.mrf.mxu0
      %v597 = vadd.f32 0.0, %v596
      %598 = vmatmul.f32.gmra.mxu0 %v535
      %v599 = vpop.f32.mrf.mxu0
      %v600 = vadd.f32 0.0, %v599
      %601 = vmatmul.f32.gmra.mxu0 %v538
      %v602 = vpop.f32.mrf.mxu0
      %v603 = vadd.f32 0.0, %v602
      %604 = vmatmul.f32.gmra.mxu0 %v541
      %v605 = vpop.f32.mrf.mxu0
      %v606 = vadd.f32 0.0, %v605
      %607 = vmatmul.f32.gmra.mxu0 %v544
      %v608 = vpop.f32.mrf.mxu0
      %v609 = vadd.f32 0.0, %v608
      %610 = vmatmul.f32.gmra.mxu0 %v547
      %v611 = vpop.f32.mrf.mxu0
      %v612 = vadd.f32 0.0, %v611
      %613 = vmatmul.f32.gmra.mxu0 %v550
      %v614 = vpop.f32.mrf.mxu0
      %v615 = vadd.f32 0.0, %v614
      %616 = vmatmul.f32.gmra.mxu0 %v553
      %v617 = vpop.f32.mrf.mxu0
      %v618 = vadd.f32 0.0, %v617
      %619 = vmatmul.f32.gmra.mxu0 %v556
      %v620 = vpop.f32.mrf.mxu0
      %v621 = vadd.f32 0.0, %v620
      %622 = vmatmul.f32.gmra.mxu0 %v559
      %v623 = vpop.f32.mrf.mxu0
      %v624 = vadd.f32 0.0, %v623
      %625 = vmatmul.f32.gmra.mxu0 %v562
      %v626 = vpop.f32.mrf.mxu0
      %v627 = vadd.f32 0.0, %v626
      %628 = vmatmul.f32.gmra.mxu0 %v565
      %v629 = vpop.f32.mrf.mxu0
      %v630 = vadd.f32 0.0, %v629
      %631 = vdwg.mxu0
      %v632 = vld [vmem:[%s418] sm:$0xff]
      %v633 = vld [vmem:[%s418 + $0x8] sm:$0xff]
      %v634 = vld [vmem:[%s418 + $0x10] sm:$0xff]
      %v635 = vld [vmem:[%s418 + $0x18] sm:$0xff]
      %v636 = vld [vmem:[%s418 + $0x20] sm:$0xff]
      %v637 = vld [vmem:[%s418 + $0x28] sm:$0xff]
      %v638 = vld [vmem:[%s418 + $0x30] sm:$0xff]
      %v639 = vld [vmem:[%s418 + $0x38] sm:$0xff]
      %v640 = vld [vmem:[%s418 + $0x40] sm:$0xff]
      %v641 = vld [vmem:[%s418 + $0x48] sm:$0xff]
      %v642 = vld [vmem:[%s418 + $0x50] sm:$0xff]
      %v643 = vld [vmem:[%s418 + $0x58] sm:$0xff]
      %v644 = vld [vmem:[%s418 + $0x60] sm:$0xff]
      %v645 = vld [vmem:[%s418 + $0x68] sm:$0xff]
      %v646 = vld [vmem:[%s418 + $0x70] sm:$0xff]
      %v647 = vld [vmem:[%s418 + $0x78] sm:$0xff]
      %649 = vset.pattern.permute.xlu0 0
      %650 = vperm.xlu0 %649, %v632
      %v651 = vpop.permute.xlu0 %650
      %654 = vset.pattern.permute.xlu0 0
      %655 = vperm.xlu0 %654, %v633
      %v656 = vpop.permute.xlu0 %655
      %659 = vset.pattern.permute.xlu0 0
      %660 = vperm.xlu0 %659, %v634
      %v661 = vpop.permute.xlu0 %660
      %664 = vset.pattern.permute.xlu0 0
      %665 = vperm.xlu0 %664, %v635
      %v666 = vpop.permute.xlu0 %665
      %669 = vset.pattern.permute.xlu0 0
      %670 = vperm.xlu0 %669, %v636
      %v671 = vpop.permute.xlu0 %670
      %674 = vset.pattern.permute.xlu0 0
      %675 = vperm.xlu0 %674, %v637
      %v676 = vpop.permute.xlu0 %675
      %679 = vset.pattern.permute.xlu0 0
      %680 = vperm.xlu0 %679, %v638
      %v681 = vpop.permute.xlu0 %680
      %684 = vset.pattern.permute.xlu0 0
      %685 = vperm.xlu0 %684, %v639
      %v686 = vpop.permute.xlu0 %685
      %689 = vset.pattern.permute.xlu0 0
      %690 = vperm.xlu0 %689, %v640
      %v691 = vpop.permute.xlu0 %690
      %694 = vset.pattern.permute.xlu0 0
      %695 = vperm.xlu0 %694, %v641
      %v696 = vpop.permute.xlu0 %695
      %699 = vset.pattern.permute.xlu0 0
      %700 = vperm.xlu0 %699, %v642
      %v701 = vpop.permute.xlu0 %700
      %704 = vset.pattern.permute.xlu0 0
      %705 = vperm.xlu0 %704, %v643
      %v706 = vpop.permute.xlu0 %705
      %709 = vset.pattern.permute.xlu0 0
      %710 = vperm.xlu0 %709, %v644
      %v711 = vpop.permute.xlu0 %710
      %714 = vset.pattern.permute.xlu0 0
      %715 = vperm.xlu0 %714, %v645
      %v716 = vpop.permute.xlu0 %715
      %719 = vset.pattern.permute.xlu0 0
      %720 = vperm.xlu0 %719, %v646
      %v721 = vpop.permute.xlu0 %720
      %724 = vset.pattern.permute.xlu0 0
      %725 = vperm.xlu0 %724, %v647
      %v726 = vpop.permute.xlu0 %725
      %v728 = vsub.f32 %v585, %v651
      %v729 = vsub.f32 %v588, %v656
      %v730 = vsub.f32 %v591, %v661
      %v731 = vsub.f32 %v594, %v666
      %v732 = vsub.f32 %v597, %v671
      %v733 = vsub.f32 %v600, %v676
      %v734 = vsub.f32 %v603, %v681
      %v735 = vsub.f32 %v606, %v686
      %v736 = vsub.f32 %v609, %v691
      %v737 = vsub.f32 %v612, %v696
      %v738 = vsub.f32 %v615, %v701
      %v739 = vsub.f32 %v618, %v706
      %v740 = vsub.f32 %v621, %v711
      %v741 = vsub.f32 %v624, %v716
      %v742 = vsub.f32 %v627, %v721
      %v743 = vsub.f32 %v630, %v726
      %v744 = vld [vmem:[%s396] sm:$0x1]
      %v746 = vperm.slane %v744, 0
      %v748 = vmul.f32 %v728, %v746
      %v749 = vmul.f32 %v729, %v746
      %v750 = vmul.f32 %v730, %v746
      %v751 = vmul.f32 %v731, %v746
      %v752 = vmul.f32 %v732, %v746
      %v753 = vmul.f32 %v733, %v746
      %v754 = vmul.f32 %v734, %v746
      %v755 = vmul.f32 %v735, %v746
      %v756 = vmul.f32 %v736, %v746
      %v757 = vmul.f32 %v737, %v746
      %v758 = vmul.f32 %v738, %v746
      %v759 = vmul.f32 %v739, %v746
      %v760 = vmul.f32 %v740, %v746
      %v761 = vmul.f32 %v741, %v746
      %v762 = vmul.f32 %v742, %v746
      %v763 = vmul.f32 %v743, %v746
      %v764 = vld [vmem:[%s399] sm:$0x1]
      %v766 = vperm.slane %v764, 0
      %v768 = vadd.f32 %v748, %v766
      %v769 = vadd.f32 %v749, %v766
      %v770 = vadd.f32 %v750, %v766
      %v771 = vadd.f32 %v751, %v766
      %v772 = vadd.f32 %v752, %v766
      %v773 = vadd.f32 %v753, %v766
      %v774 = vadd.f32 %v754, %v766
      %v775 = vadd.f32 %v755, %v766
      %v776 = vadd.f32 %v756, %v766
      %v777 = vadd.f32 %v757, %v766
      %v778 = vadd.f32 %v758, %v766
      %v779 = vadd.f32 %v759, %v766
      %v780 = vadd.f32 %v760, %v766
      %v781 = vadd.f32 %v761, %v766
      %v782 = vadd.f32 %v762, %v766
      %v783 = vadd.f32 %v763, %v766
      %v784 = vld [vmem:[#allocation2] sm:$0xff]
      %v785 = vld [vmem:[#allocation2 + $0x8] sm:$0xff]
      %v786 = vld [vmem:[#allocation2 + $0x10] sm:$0xff]
      %v787 = vld [vmem:[#allocation2 + $0x18] sm:$0xff]
      %v788 = vld [vmem:[#allocation2 + $0x20] sm:$0xff]
      %v789 = vld [vmem:[#allocation2 + $0x28] sm:$0xff]
      %v790 = vld [vmem:[#allocation2 + $0x30] sm:$0xff]
      %v791 = vld [vmem:[#allocation2 + $0x38] sm:$0xff]
      %v792 = vld [vmem:[#allocation2 + $0x40] sm:$0xff]
      %v793 = vld [vmem:[#allocation2 + $0x48] sm:$0xff]
      %v794 = vld [vmem:[#allocation2 + $0x50] sm:$0xff]
      %v795 = vld [vmem:[#allocation2 + $0x58] sm:$0xff]
      %v796 = vld [vmem:[#allocation2 + $0x60] sm:$0xff]
      %v797 = vld [vmem:[#allocation2 + $0x68] sm:$0xff]
      %v798 = vld [vmem:[#allocation2 + $0x70] sm:$0xff]
      %v799 = vld [vmem:[#allocation2 + $0x78] sm:$0xff]
      %800 = vmax.xlane.f32.xlu0 %v768
      %v801 = vpop.xlane.xlu0 %800
      %802 = vmax.xlane.f32.xlu0 %v769
      %v803 = vpop.xlane.xlu0 %802
      %804 = vmax.xlane.f32.xlu0 %v770
      %v805 = vpop.xlane.xlu0 %804
      %806 = vmax.xlane.f32.xlu0 %v771
      %v807 = vpop.xlane.xlu0 %806
      %808 = vmax.xlane.f32.xlu0 %v772
      %v809 = vpop.xlane.xlu0 %808
      %810 = vmax.xlane.f32.xlu0 %v773
      %v811 = vpop.xlane.xlu0 %810
      %812 = vmax.xlane.f32.xlu0 %v774
      %v813 = vpop.xlane.xlu0 %812
      %814 = vmax.xlane.f32.xlu0 %v775
      %v815 = vpop.xlane.xlu0 %814
      %816 = vmax.xlane.f32.xlu0 %v776
      %v817 = vpop.xlane.xlu0 %816
      %818 = vmax.xlane.f32.xlu0 %v777
      %v819 = vpop.xlane.xlu0 %818
      %820 = vmax.xlane.f32.xlu0 %v778
      %v821 = vpop.xlane.xlu0 %820
      %822 = vmax.xlane.f32.xlu0 %v779
      %v823 = vpop.xlane.xlu0 %822
      %824 = vmax.xlane.f32.xlu0 %v780
      %v825 = vpop.xlane.xlu0 %824
      %826 = vmax.xlane.f32.xlu0 %v781
      %v827 = vpop.xlane.xlu0 %826
      %828 = vmax.xlane.f32.xlu0 %v782
      %v829 = vpop.xlane.xlu0 %828
      %830 = vmax.xlane.f32.xlu0 %v783
      %v831 = vpop.xlane.xlu0 %830
      %v832 = vmax.f32 %v784, %v801
      %v833 = vmax.f32 %v785, %v803
      %v834 = vmax.f32 %v786, %v805
      %v835 = vmax.f32 %v787, %v807
      %v836 = vmax.f32 %v788, %v809
      %v837 = vmax.f32 %v789, %v811
      %v838 = vmax.f32 %v790, %v813
      %v839 = vmax.f32 %v791, %v815
      %v840 = vmax.f32 %v792, %v817
      %v841 = vmax.f32 %v793, %v819
      %v842 = vmax.f32 %v794, %v821
      %v843 = vmax.f32 %v795, %v823
      %v844 = vmax.f32 %v796, %v825
      %v845 = vmax.f32 %v797, %v827
      %v846 = vmax.f32 %v798, %v829
      %v847 = vmax.f32 %v799, %v831
      %v848 = vsub.f32 %v784, %v832
      %v849 = vsub.f32 %v785, %v833
      %v850 = vsub.f32 %v786, %v834
      %v851 = vsub.f32 %v787, %v835
      %v852 = vsub.f32 %v788, %v836
      %v853 = vsub.f32 %v789, %v837
      %v854 = vsub.f32 %v790, %v838
      %v855 = vsub.f32 %v791, %v839
      %v856 = vsub.f32 %v792, %v840
      %v857 = vsub.f32 %v793, %v841
      %v858 = vsub.f32 %v794, %v842
      %v859 = vsub.f32 %v795, %v843
      %v860 = vsub.f32 %v796, %v844
      %v861 = vsub.f32 %v797, %v845
      %v862 = vsub.f32 %v798, %v846
      %v863 = vsub.f32 %v799, %v847
      %v864 = vmul.f32 %v848, 1.442695
      %v865 = vpow.pop %v864
      %v866 = vmul.f32 %v849, 1.442695
      %v867 = vpow.pop %v866
      %v868 = vmul.f32 %v850, 1.442695
      %v869 = vpow.pop %v868
      %v870 = vmul.f32 %v851, 1.442695
      %v871 = vpow.pop %v870
      %v872 = vmul.f32 %v852, 1.442695
      %v873 = vpow.pop %v872
      %v874 = vmul.f32 %v853, 1.442695
      %v875 = vpow.pop %v874
      %v876 = vmul.f32 %v854, 1.442695
      %v877 = vpow.pop %v876
      %v878 = vmul.f32 %v855, 1.442695
      %v879 = vpow.pop %v878
      %v880 = vmul.f32 %v856, 1.442695
      %v881 = vpow.pop %v880
      %v882 = vmul.f32 %v857, 1.442695
      %v883 = vpow.pop %v882
      %v884 = vmul.f32 %v858, 1.442695
      %v885 = vpow.pop %v884
      %v886 = vmul.f32 %v859, 1.442695
      %v887 = vpow.pop %v886
      %v888 = vmul.f32 %v860, 1.442695
      %v889 = vpow.pop %v888
      %v890 = vmul.f32 %v861, 1.442695
      %v891 = vpow.pop %v890
      %v892 = vmul.f32 %v862, 1.442695
      %v893 = vpow.pop %v892
      %v894 = vmul.f32 %v863, 1.442695
      %v895 = vpow.pop %v894
      %897 = vset.pattern.permute.xlu0 0
      %898 = vperm.xlu0 %897, %v832
      %v899 = vpop.permute.xlu0 %898
      %902 = vset.pattern.permute.xlu0 0
      %903 = vperm.xlu0 %902, %v833
      %v904 = vpop.permute.xlu0 %903
      %907 = vset.pattern.permute.xlu0 0
      %908 = vperm.xlu0 %907, %v834
      %v909 = vpop.permute.xlu0 %908
      %912 = vset.pattern.permute.xlu0 0
      %913 = vperm.xlu0 %912, %v835
      %v914 = vpop.permute.xlu0 %913
      %917 = vset.pattern.permute.xlu0 0
      %918 = vperm.xlu0 %917, %v836
      %v919 = vpop.permute.xlu0 %918
      %922 = vset.pattern.permute.xlu0 0
      %923 = vperm.xlu0 %922, %v837
      %v924 = vpop.permute.xlu0 %923
      %927 = vset.pattern.permute.xlu0 0
      %928 = vperm.xlu0 %927, %v838
      %v929 = vpop.permute.xlu0 %928
      %932 = vset.pattern.permute.xlu0 0
      %933 = vperm.xlu0 %932, %v839
      %v934 = vpop.permute.xlu0 %933
      %937 = vset.pattern.permute.xlu0 0
      %938 = vperm.xlu0 %937, %v840
      %v939 = vpop.permute.xlu0 %938
      %942 = vset.pattern.permute.xlu0 0
      %943 = vperm.xlu0 %942, %v841
      %v944 = vpop.permute.xlu0 %943
      %947 = vset.pattern.permute.xlu0 0
      %948 = vperm.xlu0 %947, %v842
      %v949 = vpop.permute.xlu0 %948
      %952 = vset.pattern.permute.xlu0 0
      %953 = vperm.xlu0 %952, %v843
      %v954 = vpop.permute.xlu0 %953
      %957 = vset.pattern.permute.xlu0 0
      %958 = vperm.xlu0 %957, %v844
      %v959 = vpop.permute.xlu0 %958
      %962 = vset.pattern.permute.xlu0 0
      %963 = vperm.xlu0 %962, %v845
      %v964 = vpop.permute.xlu0 %963
      %967 = vset.pattern.permute.xlu0 0
      %968 = vperm.xlu0 %967, %v846
      %v969 = vpop.permute.xlu0 %968
      %972 = vset.pattern.permute.xlu0 0
      %973 = vperm.xlu0 %972, %v847
      %v974 = vpop.permute.xlu0 %973
      %v976 = vsub.f32 %v768, %v899
      %v977 = vsub.f32 %v769, %v904
      %v978 = vsub.f32 %v770, %v909
      %v979 = vsub.f32 %v771, %v914
      %v980 = vsub.f32 %v772, %v919
      %v981 = vsub.f32 %v773, %v924
      %v982 = vsub.f32 %v774, %v929
      %v983 = vsub.f32 %v775, %v934
      %v984 = vsub.f32 %v776, %v939
      %v985 = vsub.f32 %v777, %v944
      %v986 = vsub.f32 %v778, %v949
      %v987 = vsub.f32 %v779, %v954
      %v988 = vsub.f32 %v780, %v959
      %v989 = vsub.f32 %v781, %v964
      %v990 = vsub.f32 %v782, %v969
      %v991 = vsub.f32 %v783, %v974
      %v992 = vmul.f32 %v976, 1.442695
      %v993 = vpow.pop %v992
      %v994 = vmul.f32 %v977, 1.442695
      %v995 = vpow.pop %v994
      %v996 = vmul.f32 %v978, 1.442695
      %v997 = vpow.pop %v996
      %v998 = vmul.f32 %v979, 1.442695
      %v999 = vpow.pop %v998
      %v1000 = vmul.f32 %v980, 1.442695
      %v1001 = vpow.pop %v1000
      %v1002 = vmul.f32 %v981, 1.442695
      %v1003 = vpow.pop %v1002
      %v1004 = vmul.f32 %v982, 1.442695
      %v1005 = vpow.pop %v1004
      %v1006 = vmul.f32 %v983, 1.442695
      %v1007 = vpow.pop %v1006
      %v1008 = vmul.f32 %v984, 1.442695
      %v1009 = vpow.pop %v1008
      %v1010 = vmul.f32 %v985, 1.442695
      %v1011 = vpow.pop %v1010
      %v1012 = vmul.f32 %v986, 1.442695
      %v1013 = vpow.pop %v1012
      %v1014 = vmul.f32 %v987, 1.442695
      %v1015 = vpow.pop %v1014
      %v1016 = vmul.f32 %v988, 1.442695
      %v1017 = vpow.pop %v1016
      %v1018 = vmul.f32 %v989, 1.442695
      %v1019 = vpow.pop %v1018
      %v1020 = vmul.f32 %v990, 1.442695
      %v1021 = vpow.pop %v1020
      %v1022 = vmul.f32 %v991, 1.442695
      %v1023 = vpow.pop %v1022
      %v1024 = vld [vmem:[#allocation3] sm:$0xff]
      %v1025 = vld [vmem:[#allocation3 + $0x8] sm:$0xff]
      %v1026 = vld [vmem:[#allocation3 + $0x10] sm:$0xff]
      %v1027 = vld [vmem:[#allocation3 + $0x18] sm:$0xff]
      %v1028 = vld [vmem:[#allocation3 + $0x20] sm:$0xff]
      %v1029 = vld [vmem:[#allocation3 + $0x28] sm:$0xff]
      %v1030 = vld [vmem:[#allocation3 + $0x30] sm:$0xff]
      %v1031 = vld [vmem:[#allocation3 + $0x38] sm:$0xff]
      %v1032 = vld [vmem:[#allocation3 + $0x40] sm:$0xff]
      %v1033 = vld [vmem:[#allocation3 + $0x48] sm:$0xff]
      %v1034 = vld [vmem:[#allocation3 + $0x50] sm:$0xff]
      %v1035 = vld [vmem:[#allocation3 + $0x58] sm:$0xff]
      %v1036 = vld [vmem:[#allocation3 + $0x60] sm:$0xff]
      %v1037 = vld [vmem:[#allocation3 + $0x68] sm:$0xff]
      %v1038 = vld [vmem:[#allocation3 + $0x70] sm:$0xff]
      %v1039 = vld [vmem:[#allocation3 + $0x78] sm:$0xff]
      %v1040 = vmul.f32 %v865, %v1024
      %v1041 = vmul.f32 %v867, %v1025
      %v1042 = vmul.f32 %v869, %v1026
      %v1043 = vmul.f32 %v871, %v1027
      %v1044 = vmul.f32 %v873, %v1028
      %v1045 = vmul.f32 %v875, %v1029
      %v1046 = vmul.f32 %v877, %v1030
      %v1047 = vmul.f32 %v879, %v1031
      %v1048 = vmul.f32 %v881, %v1032
      %v1049 = vmul.f32 %v883, %v1033
      %v1050 = vmul.f32 %v885, %v1034
      %v1051 = vmul.f32 %v887, %v1035
      %v1052 = vmul.f32 %v889, %v1036
      %v1053 = vmul.f32 %v891, %v1037
      %v1054 = vmul.f32 %v893, %v1038
      %v1055 = vmul.f32 %v895, %v1039
      %1056 = vadd.xlane.f32.xlu0 %v993
      %v1057 = vpop.xlane.xlu0 %1056
      %1058 = vadd.xlane.f32.xlu0 %v995
      %v1059 = vpop.xlane.xlu0 %1058
      %1060 = vadd.xlane.f32.xlu0 %v997
      %v1061 = vpop.xlane.xlu0 %1060
      %1062 = vadd.xlane.f32.xlu0 %v999
      %v1063 = vpop.xlane.xlu0 %1062
      %1064 = vadd.xlane.f32.xlu0 %v1001
      %v1065 = vpop.xlane.xlu0 %1064
      %1066 = vadd.xlane.f32.xlu0 %v1003
      %v1067 = vpop.xlane.xlu0 %1066
      %1068 = vadd.xlane.f32.xlu0 %v1005
      %v1069 = vpop.xlane.xlu0 %1068
      %1070 = vadd.xlane.f32.xlu0 %v1007
      %v1071 = vpop.xlane.xlu0 %1070
      %1072 = vadd.xlane.f32.xlu0 %v1009
      %v1073 = vpop.xlane.xlu0 %1072
      %1074 = vadd.xlane.f32.xlu0 %v1011
      %v1075 = vpop.xlane.xlu0 %1074
      %1076 = vadd.xlane.f32.xlu0 %v1013
      %v1077 = vpop.xlane.xlu0 %1076
      %1078 = vadd.xlane.f32.xlu0 %v1015
      %v1079 = vpop.xlane.xlu0 %1078
      %1080 = vadd.xlane.f32.xlu0 %v1017
      %v1081 = vpop.xlane.xlu0 %1080
      %1082 = vadd.xlane.f32.xlu0 %v1019
      %v1083 = vpop.xlane.xlu0 %1082
      %1084 = vadd.xlane.f32.xlu0 %v1021
      %v1085 = vpop.xlane.xlu0 %1084
      %1086 = vadd.xlane.f32.xlu0 %v1023
      %v1087 = vpop.xlane.xlu0 %1086
      %v1088 = vadd.f32 %v1040, %v1057
      %v1089 = vadd.f32 %v1041, %v1059
      %v1090 = vadd.f32 %v1042, %v1061
      %v1091 = vadd.f32 %v1043, %v1063
      %v1092 = vadd.f32 %v1044, %v1065
      %v1093 = vadd.f32 %v1045, %v1067
      %v1094 = vadd.f32 %v1046, %v1069
      %v1095 = vadd.f32 %v1047, %v1071
      %v1096 = vadd.f32 %v1048, %v1073
      %v1097 = vadd.f32 %v1049, %v1075
      %v1098 = vadd.f32 %v1050, %v1077
      %v1099 = vadd.f32 %v1051, %v1079
      %v1100 = vadd.f32 %v1052, %v1081
      %v1101 = vadd.f32 %v1053, %v1083
      %v1102 = vadd.f32 %v1054, %v1085
      %v1103 = vadd.f32 %v1055, %v1087
      %vm1104 = vcmask 7168
      %1105 = vst.msk [vmem:[#allocation3] sm:$0xff] %vm1104, %v1088
      %1106 = vst.msk [vmem:[#allocation3 + $0x8] sm:$0xff] %vm1104, %v1089
      %1107 = vst.msk [vmem:[#allocation3 + $0x10] sm:$0xff] %vm1104, %v1090
      %1108 = vst.msk [vmem:[#allocation3 + $0x18] sm:$0xff] %vm1104, %v1091
      %1109 = vst.msk [vmem:[#allocation3 + $0x20] sm:$0xff] %vm1104, %v1092
      %1110 = vst.msk [vmem:[#allocation3 + $0x28] sm:$0xff] %vm1104, %v1093
      %1111 = vst.msk [vmem:[#allocation3 + $0x30] sm:$0xff] %vm1104, %v1094
      %1112 = vst.msk [vmem:[#allocation3 + $0x38] sm:$0xff] %vm1104, %v1095
      %1113 = vst.msk [vmem:[#allocation3 + $0x40] sm:$0xff] %vm1104, %v1096
      %1114 = vst.msk [vmem:[#allocation3 + $0x48] sm:$0xff] %vm1104, %v1097
      %1115 = vst.msk [vmem:[#allocation3 + $0x50] sm:$0xff] %vm1104, %v1098
      %1116 = vst.msk [vmem:[#allocation3 + $0x58] sm:$0xff] %vm1104, %v1099
      %1117 = vst.msk [vmem:[#allocation3 + $0x60] sm:$0xff] %vm1104, %v1100
      %1118 = vst.msk [vmem:[#allocation3 + $0x68] sm:$0xff] %vm1104, %v1101
      %1119 = vst.msk [vmem:[#allocation3 + $0x70] sm:$0xff] %vm1104, %v1102
      %1120 = vst.msk [vmem:[#allocation3 + $0x78] sm:$0xff] %vm1104, %v1103
      %v1121 = vld [vmem:[#allocation4] sm:$0xff]
      %v1122 = vld [vmem:[#allocation4 + $0x8] sm:$0xff]
      %v1123 = vld [vmem:[#allocation4 + $0x10] sm:$0xff]
      %v1124 = vld [vmem:[#allocation4 + $0x18] sm:$0xff]
      %v1125 = vld [vmem:[#allocation4 + $0x20] sm:$0xff]
      %v1126 = vld [vmem:[#allocation4 + $0x28] sm:$0xff]
      %v1127 = vld [vmem:[#allocation4 + $0x30] sm:$0xff]
      %v1128 = vld [vmem:[#allocation4 + $0x38] sm:$0xff]
      %v1129 = vld [vmem:[#allocation4 + $0x40] sm:$0xff]
      %v1130 = vld [vmem:[#allocation4 + $0x48] sm:$0xff]
      %v1131 = vld [vmem:[#allocation4 + $0x50] sm:$0xff]
      %v1132 = vld [vmem:[#allocation4 + $0x58] sm:$0xff]
      %v1133 = vld [vmem:[#allocation4 + $0x60] sm:$0xff]
      %v1134 = vld [vmem:[#allocation4 + $0x68] sm:$0xff]
      %v1135 = vld [vmem:[#allocation4 + $0x70] sm:$0xff]
      %v1136 = vld [vmem:[#allocation4 + $0x78] sm:$0xff]
      %1138 = vset.pattern.permute.xlu0 0
      %1139 = vperm.xlu0 %1138, %v865
      %v1140 = vpop.permute.xlu0 %1139
      %1143 = vset.pattern.permute.xlu0 0
      %1144 = vperm.xlu0 %1143, %v867
      %v1145 = vpop.permute.xlu0 %1144
      %1148 = vset.pattern.permute.xlu0 0
      %1149 = vperm.xlu0 %1148, %v869
      %v1150 = vpop.permute.xlu0 %1149
      %1153 = vset.pattern.permute.xlu0 0
      %1154 = vperm.xlu0 %1153, %v871
      %v1155 = vpop.permute.xlu0 %1154
      %1158 = vset.pattern.permute.xlu0 0
      %1159 = vperm.xlu0 %1158, %v873
      %v1160 = vpop.permute.xlu0 %1159
      %1163 = vset.pattern.permute.xlu0 0
      %1164 = vperm.xlu0 %1163, %v875
      %v1165 = vpop.permute.xlu0 %1164
      %1168 = vset.pattern.permute.xlu0 0
      %1169 = vperm.xlu0 %1168, %v877
      %v1170 = vpop.permute.xlu0 %1169
      %1173 = vset.pattern.permute.xlu0 0
      %1174 = vperm.xlu0 %1173, %v879
      %v1175 = vpop.permute.xlu0 %1174
      %1178 = vset.pattern.permute.xlu0 0
      %1179 = vperm.xlu0 %1178, %v881
      %v1180 = vpop.permute.xlu0 %1179
      %1183 = vset.pattern.permute.xlu0 0
      %1184 = vperm.xlu0 %1183, %v883
      %v1185 = vpop.permute.xlu0 %1184
      %1188 = vset.pattern.permute.xlu0 0
      %1189 = vperm.xlu0 %1188, %v885
      %v1190 = vpop.permute.xlu0 %1189
      %1193 = vset.pattern.permute.xlu0 0
      %1194 = vperm.xlu0 %1193, %v887
      %v1195 = vpop.permute.xlu0 %1194
      %1198 = vset.pattern.permute.xlu0 0
      %1199 = vperm.xlu0 %1198, %v889
      %v1200 = vpop.permute.xlu0 %1199
      %1203 = vset.pattern.permute.xlu0 0
      %1204 = vperm.xlu0 %1203, %v891
      %v1205 = vpop.permute.xlu0 %1204
      %1208 = vset.pattern.permute.xlu0 0
      %1209 = vperm.xlu0 %1208, %v893
      %v1210 = vpop.permute.xlu0 %1209
      %1213 = vset.pattern.permute.xlu0 0
      %1214 = vperm.xlu0 %1213, %v895
      %v1215 = vpop.permute.xlu0 %1214
      %v1217 = vmul.f32 %v1140, %v1121
      %v1218 = vmul.f32 %v1145, %v1122
      %v1219 = vmul.f32 %v1150, %v1123
      %v1220 = vmul.f32 %v1155, %v1124
      %v1221 = vmul.f32 %v1160, %v1125
      %v1222 = vmul.f32 %v1165, %v1126
      %v1223 = vmul.f32 %v1170, %v1127
      %v1224 = vmul.f32 %v1175, %v1128
      %v1225 = vmul.f32 %v1180, %v1129
      %v1226 = vmul.f32 %v1185, %v1130
      %v1227 = vmul.f32 %v1190, %v1131
      %v1228 = vmul.f32 %v1195, %v1132
      %v1229 = vmul.f32 %v1200, %v1133
      %v1230 = vmul.f32 %v1205, %v1134
      %v1231 = vmul.f32 %v1210, %v1135
      %v1232 = vmul.f32 %v1215, %v1136
      %v1233 = vpack.c.bf16 %v995, %v993
      %v1234 = vpack.c.bf16 %v999, %v997
      %v1235 = vpack.c.bf16 %v1003, %v1001
      %v1236 = vpack.c.bf16 %v1007, %v1005
      %v1237 = vpack.c.bf16 %v1011, %v1009
      %v1238 = vpack.c.bf16 %v1015, %v1013
      %v1239 = vpack.c.bf16 %v1019, %v1017
      %v1240 = vpack.c.bf16 %v1023, %v1021
      %v1241 = vld [vmem:[%s428] sm:$0xf]
      %v1242 = vld [vmem:[%s428 + $0x4] sm:$0xf]
      %v1243 = vld [vmem:[%s428 + $0x8] sm:$0xf]
      %v1244 = vld [vmem:[%s428 + $0xc] sm:$0xf]
      %v1245 = vld [vmem:[%s428 + $0x10] sm:$0xf]
      %v1246 = vld [vmem:[%s428 + $0x14] sm:$0xf]
      %v1247 = vld [vmem:[%s428 + $0x18] sm:$0xf]
      %v1248 = vld [vmem:[%s428 + $0x1c] sm:$0xf]
      %v1249 = vld [vmem:[%s428 + $0x20] sm:$0xf]
      %v1250 = vld [vmem:[%s428 + $0x24] sm:$0xf]
      %v1251 = vld [vmem:[%s428 + $0x28] sm:$0xf]
      %v1252 = vld [vmem:[%s428 + $0x2c] sm:$0xf]
      %v1253 = vld [vmem:[%s428 + $0x30] sm:$0xf]
      %v1254 = vld [vmem:[%s428 + $0x34] sm:$0xf]
      %v1255 = vld [vmem:[%s428 + $0x38] sm:$0xf]
      %v1256 = vld [vmem:[%s428 + $0x3c] sm:$0xf]
      %v1273 = vunpack.c.l.b16 %v1241
      %v1274 = vunpack.c.l.b16 %v1242
      %v1275 = vunpack.c.l.b16 %v1243
      %v1276 = vunpack.c.l.b16 %v1244
      %v1277 = vunpack.c.l.b16 %v1245
      %v1278 = vunpack.c.l.b16 %v1246
      %v1279 = vunpack.c.l.b16 %v1247
      %v1280 = vunpack.c.l.b16 %v1248
      %v1281 = vunpack.c.l.b16 %v1249
      %v1282 = vunpack.c.l.b16 %v1250
      %v1283 = vunpack.c.l.b16 %v1251
      %v1284 = vunpack.c.l.b16 %v1252
      %v1285 = vunpack.c.l.b16 %v1253
      %v1286 = vunpack.c.l.b16 %v1254
      %v1287 = vunpack.c.l.b16 %v1255
      %v1288 = vunpack.c.l.b16 %v1256
      %v1289 = vpack.c.b16 %v1274, %v1273
      %v1290 = vpack.c.b16 %v1276, %v1275
      %v1291 = vpack.c.b16 %v1278, %v1277
      %v1292 = vpack.c.b16 %v1280, %v1279
      %v1293 = vpack.c.b16 %v1282, %v1281
      %v1294 = vpack.c.b16 %v1284, %v1283
      %v1295 = vpack.c.b16 %v1286, %v1285
      %v1296 = vpack.c.b16 %v1288, %v1287
      %1305 = vmatpush.bf16.msra.mxu0 %v1296
      %1306 = vmatpush.bf16.msra.mxu0 %v1295
      %1307 = vmatpush.bf16.msra.mxu0 %v1294
      %1308 = vmatpush.bf16.msra.mxu0 %v1293
      %1309 = vmatpush.bf16.msra.mxu0 %v1292
      %1310 = vmatpush.bf16.msra.mxu0 %v1291
      %1311 = vmatpush.bf16.msra.mxu0 %v1290
      %1312 = vmatpush.bf16.msra.mxu0 %v1289
      %1313 = vmatmul.bf16.gmra.mxu0 %v1233
      %v1314 = vpop.f32.mrf.mxu0
      %v1315 = vadd.f32 0.0, %v1314
      %v1316 = vpop.f32.mrf.mxu0
      %v1317 = vadd.f32 0.0, %v1316
      %1318 = vmatmul.bf16.gmra.mxu0 %v1234
      %v1319 = vpop.f32.mrf.mxu0
      %v1320 = vadd.f32 0.0, %v1319
      %v1321 = vpop.f32.mrf.mxu0
      %v1322 = vadd.f32 0.0, %v1321
      %1323 = vmatmul.bf16.gmra.mxu0 %v1235
      %v1324 = vpop.f32.mrf.mxu0
      %v1325 = vadd.f32 0.0, %v1324
      %v1326 = vpop.f32.mrf.mxu0
      %v1327 = vadd.f32 0.0, %v1326
      %1328 = vmatmul.bf16.gmra.mxu0 %v1236
      %v1329 = vpop.f32.mrf.mxu0
      %v1330 = vadd.f32 0.0, %v1329
      %v1331 = vpop.f32.mrf.mxu0
      %v1332 = vadd.f32 0.0, %v1331
      %1333 = vmatmul.bf16.gmra.mxu0 %v1237
      %v1334 = vpop.f32.mrf.mxu0
      %v1335 = vadd.f32 0.0, %v1334
      %v1336 = vpop.f32.mrf.mxu0
      %v1337 = vadd.f32 0.0, %v1336
      %1338 = vmatmul.bf16.gmra.mxu0 %v1238
      %v1339 = vpop.f32.mrf.mxu0
      %v1340 = vadd.f32 0.0, %v1339
      %v1341 = vpop.f32.mrf.mxu0
      %v1342 = vadd.f32 0.0, %v1341
      %1343 = vmatmul.bf16.gmra.mxu0 %v1239
      %v1344 = vpop.f32.mrf.mxu0
      %v1345 = vadd.f32 0.0, %v1344
      %v1346 = vpop.f32.mrf.mxu0
      %v1347 = vadd.f32 0.0, %v1346
      %1348 = vmatmul.bf16.gmra.mxu0 %v1240
      %v1349 = vpop.f32.mrf.mxu0
      %v1350 = vadd.f32 0.0, %v1349
      %v1351 = vpop.f32.mrf.mxu0
      %v1352 = vadd.f32 0.0, %v1351
      %1353 = vdwg.mxu0
      %v1354 = vadd.f32 %v1217, %v1315
      %v1355 = vadd.f32 %v1218, %v1317
      %v1356 = vadd.f32 %v1219, %v1320
      %v1357 = vadd.f32 %v1220, %v1322
      %v1358 = vadd.f32 %v1221, %v1325
      %v1359 = vadd.f32 %v1222, %v1327
      %v1360 = vadd.f32 %v1223, %v1330
      %v1361 = vadd.f32 %v1224, %v1332
      %v1362 = vadd.f32 %v1225, %v1335
      %v1363 = vadd.f32 %v1226, %v1337
      %v1364 = vadd.f32 %v1227, %v1340
      %v1365 = vadd.f32 %v1228, %v1342
      %v1366 = vadd.f32 %v1229, %v1345
      %v1367 = vadd.f32 %v1230, %v1347
      %v1368 = vadd.f32 %v1231, %v1350
      %v1369 = vadd.f32 %v1232, %v1352
      %1370 = vst.msk [vmem:[#allocation4] sm:$0xff] %vm518, %v1354
      %1371 = vst.msk [vmem:[#allocation4 + $0x8] sm:$0xff] %vm518, %v1355
      %1372 = vst.msk [vmem:[#allocation4 + $0x10] sm:$0xff] %vm518, %v1356
      %1373 = vst.msk [vmem:[#allocation4 + $0x18] sm:$0xff] %vm518, %v1357
      %1374 = vst.msk [vmem:[#allocation4 + $0x20] sm:$0xff] %vm518, %v1358
      %1375 = vst.msk [vmem:[#allocation4 + $0x28] sm:$0xff] %vm518, %v1359
      %1376 = vst.msk [vmem:[#allocation4 + $0x30] sm:$0xff] %vm518, %v1360
      %1377 = vst.msk [vmem:[#allocation4 + $0x38] sm:$0xff] %vm518, %v1361
      %1378 = vst.msk [vmem:[#allocation4 + $0x40] sm:$0xff] %vm518, %v1362
      %1379 = vst.msk [vmem:[#allocation4 + $0x48] sm:$0xff] %vm518, %v1363
      %1380 = vst.msk [vmem:[#allocation4 + $0x50] sm:$0xff] %vm518, %v1364
      %1381 = vst.msk [vmem:[#allocation4 + $0x58] sm:$0xff] %vm518, %v1365
      %1382 = vst.msk [vmem:[#allocation4 + $0x60] sm:$0xff] %vm518, %v1366
      %1383 = vst.msk [vmem:[#allocation4 + $0x68] sm:$0xff] %vm518, %v1367
      %1384 = vst.msk [vmem:[#allocation4 + $0x70] sm:$0xff] %vm518, %v1368
      %1385 = vst.msk [vmem:[#allocation4 + $0x78] sm:$0xff] %vm518, %v1369
      %1386 = vst.msk [vmem:[#allocation2] sm:$0xff] %vm1104, %v832
      %1387 = vst.msk [vmem:[#allocation2 + $0x8] sm:$0xff] %vm1104, %v833
      %1388 = vst.msk [vmem:[#allocation2 + $0x10] sm:$0xff] %vm1104, %v834
      %1389 = vst.msk [vmem:[#allocation2 + $0x18] sm:$0xff] %vm1104, %v835
      %1390 = vst.msk [vmem:[#allocation2 + $0x20] sm:$0xff] %vm1104, %v836
      %1391 = vst.msk [vmem:[#allocation2 + $0x28] sm:$0xff] %vm1104, %v837
      %1392 = vst.msk [vmem:[#allocation2 + $0x30] sm:$0xff] %vm1104, %v838
      %1393 = vst.msk [vmem:[#allocation2 + $0x38] sm:$0xff] %vm1104, %v839
      %1394 = vst.msk [vmem:[#allocation2 + $0x40] sm:$0xff] %vm1104, %v840
      %1395 = vst.msk [vmem:[#allocation2 + $0x48] sm:$0xff] %vm1104, %v841
      %1396 = vst.msk [vmem:[#allocation2 + $0x50] sm:$0xff] %vm1104, %v842
      %1397 = vst.msk [vmem:[#allocation2 + $0x58] sm:$0xff] %vm1104, %v843
      %1398 = vst.msk [vmem:[#allocation2 + $0x60] sm:$0xff] %vm1104, %v844
      %1399 = vst.msk [vmem:[#allocation2 + $0x68] sm:$0xff] %vm1104, %v845
      %1400 = vst.msk [vmem:[#allocation2 + $0x70] sm:$0xff] %vm1104, %v846
      %1401 = vst.msk [vmem:[#allocation2 + $0x78] sm:$0xff] %vm1104, %v847
      // Predicated region
      $region49: #{tpu_custom_call.1} parent=43 // pred_check
        %p1402 = pneg %p440
      $region50: #{tpu_custom_call.1} parent=43 // pred_check_branch
        %1404 = sbr.rel (%p1402) target = $region52
      $region51: #{tpu_custom_call.1} parent=43 // pred_region
        %v1405 = vld [vmem:[#allocation3] sm:$0xff]
        %v1406 = vld [vmem:[#allocation3 + $0x8] sm:$0xff]
        %v1407 = vld [vmem:[#allocation3 + $0x10] sm:$0xff]
        %v1408 = vld [vmem:[#allocation3 + $0x18] sm:$0xff]
        %v1409 = vld [vmem:[#allocation3 + $0x20] sm:$0xff]
        %v1410 = vld [vmem:[#allocation3 + $0x28] sm:$0xff]
        %v1411 = vld [vmem:[#allocation3 + $0x30] sm:$0xff]
        %v1412 = vld [vmem:[#allocation3 + $0x38] sm:$0xff]
        %v1413 = vld [vmem:[#allocation3 + $0x40] sm:$0xff]
        %v1414 = vld [vmem:[#allocation3 + $0x48] sm:$0xff]
        %v1415 = vld [vmem:[#allocation3 + $0x50] sm:$0xff]
        %v1416 = vld [vmem:[#allocation3 + $0x58] sm:$0xff]
        %v1417 = vld [vmem:[#allocation3 + $0x60] sm:$0xff]
        %v1418 = vld [vmem:[#allocation3 + $0x68] sm:$0xff]
        %v1419 = vld [vmem:[#allocation3 + $0x70] sm:$0xff]
        %v1420 = vld [vmem:[#allocation3 + $0x78] sm:$0xff]
        %v1421 = vrcp.pop %v1405
        %v1422 = vrcp.pop %v1406
        %v1423 = vrcp.pop %v1407
        %v1424 = vrcp.pop %v1408
        %v1425 = vrcp.pop %v1409
        %v1426 = vrcp.pop %v1410
        %v1427 = vrcp.pop %v1411
        %v1428 = vrcp.pop %v1412
        %v1429 = vrcp.pop %v1413
        %v1430 = vrcp.pop %v1414
        %v1431 = vrcp.pop %v1415
        %v1432 = vrcp.pop %v1416
        %v1433 = vrcp.pop %v1417
        %v1434 = vrcp.pop %v1418
        %v1435 = vrcp.pop %v1419
        %v1436 = vrcp.pop %v1420
        %v1437 = vld [vmem:[#allocation4] sm:$0xff]
        %v1438 = vld [vmem:[#allocation4 + $0x8] sm:$0xff]
        %v1439 = vld [vmem:[#allocation4 + $0x10] sm:$0xff]
        %v1440 = vld [vmem:[#allocation4 + $0x18] sm:$0xff]
        %v1441 = vld [vmem:[#allocation4 + $0x20] sm:$0xff]
        %v1442 = vld [vmem:[#allocation4 + $0x28] sm:$0xff]
        %v1443 = vld [vmem:[#allocation4 + $0x30] sm:$0xff]
        %v1444 = vld [vmem:[#allocation4 + $0x38] sm:$0xff]
        %v1445 = vld [vmem:[#allocation4 + $0x40] sm:$0xff]
        %v1446 = vld [vmem:[#allocation4 + $0x48] sm:$0xff]
        %v1447 = vld [vmem:[#allocation4 + $0x50] sm:$0xff]
        %v1448 = vld [vmem:[#allocation4 + $0x58] sm:$0xff]
        %v1449 = vld [vmem:[#allocation4 + $0x60] sm:$0xff]
        %v1450 = vld [vmem:[#allocation4 + $0x68] sm:$0xff]
        %v1451 = vld [vmem:[#allocation4 + $0x70] sm:$0xff]
        %v1452 = vld [vmem:[#allocation4 + $0x78] sm:$0xff]
        %1454 = vset.pattern.permute.xlu0 0
        %1455 = vperm.xlu0 %1454, %v1421
        %v1456 = vpop.permute.xlu0 %1455
        %1459 = vset.pattern.permute.xlu0 0
        %1460 = vperm.xlu0 %1459, %v1422
        %v1461 = vpop.permute.xlu0 %1460
        %1464 = vset.pattern.permute.xlu0 0
        %1465 = vperm.xlu0 %1464, %v1423
        %v1466 = vpop.permute.xlu0 %1465
        %1469 = vset.pattern.permute.xlu0 0
        %1470 = vperm.xlu0 %1469, %v1424
        %v1471 = vpop.permute.xlu0 %1470
        %1474 = vset.pattern.permute.xlu0 0
        %1475 = vperm.xlu0 %1474, %v1425
        %v1476 = vpop.permute.xlu0 %1475
        %1479 = vset.pattern.permute.xlu0 0
        %1480 = vperm.xlu0 %1479, %v1426
        %v1481 = vpop.permute.xlu0 %1480
        %1484 = vset.pattern.permute.xlu0 0
        %1485 = vperm.xlu0 %1484, %v1427
        %v1486 = vpop.permute.xlu0 %1485
        %1489 = vset.pattern.permute.xlu0 0
        %1490 = vperm.xlu0 %1489, %v1428
        %v1491 = vpop.permute.xlu0 %1490
        %1494 = vset.pattern.permute.xlu0 0
        %1495 = vperm.xlu0 %1494, %v1429
        %v1496 = vpop.permute.xlu0 %1495
        %1499 = vset.pattern.permute.xlu0 0
        %1500 = vperm.xlu0 %1499, %v1430
        %v1501 = vpop.permute.xlu0 %1500
        %1504 = vset.pattern.permute.xlu0 0
        %1505 = vperm.xlu0 %1504, %v1431
        %v1506 = vpop.permute.xlu0 %1505
        %1509 = vset.pattern.permute.xlu0 0
        %1510 = vperm.xlu0 %1509, %v1432
        %v1511 = vpop.permute.xlu0 %1510
        %1514 = vset.pattern.permute.xlu0 0
        %1515 = vperm.xlu0 %1514, %v1433
        %v1516 = vpop.permute.xlu0 %1515
        %1519 = vset.pattern.permute.xlu0 0
        %1520 = vperm.xlu0 %1519, %v1434
        %v1521 = vpop.permute.xlu0 %1520
        %1524 = vset.pattern.permute.xlu0 0
        %1525 = vperm.xlu0 %1524, %v1435
        %v1526 = vpop.permute.xlu0 %1525
        %1529 = vset.pattern.permute.xlu0 0
        %1530 = vperm.xlu0 %1529, %v1436
        %v1531 = vpop.permute.xlu0 %1530
        %v1533 = vmul.f32 %v1437, %v1456
        %v1534 = vmul.f32 %v1438, %v1461
        %v1535 = vmul.f32 %v1439, %v1466
        %v1536 = vmul.f32 %v1440, %v1471
        %v1537 = vmul.f32 %v1441, %v1476
        %v1538 = vmul.f32 %v1442, %v1481
        %v1539 = vmul.f32 %v1443, %v1486
        %v1540 = vmul.f32 %v1444, %v1491
        %v1541 = vmul.f32 %v1445, %v1496
        %v1542 = vmul.f32 %v1446, %v1501
        %v1543 = vmul.f32 %v1447, %v1506
        %v1544 = vmul.f32 %v1448, %v1511
        %v1545 = vmul.f32 %v1449, %v1516
        %v1546 = vmul.f32 %v1450, %v1521
        %v1547 = vmul.f32 %v1451, %v1526
        %v1548 = vmul.f32 %v1452, %v1531
        %v1549 = vpack.c.bf16 %v1533, %v1533
        %v1550 = vpack.c.bf16 %v1534, %v1534
        %v1551 = vpack.c.bf16 %v1535, %v1535
        %v1552 = vpack.c.bf16 %v1536, %v1536
        %v1553 = vpack.c.bf16 %v1537, %v1537
        %v1554 = vpack.c.bf16 %v1538, %v1538
        %v1555 = vpack.c.bf16 %v1539, %v1539
        %v1556 = vpack.c.bf16 %v1540, %v1540
        %v1557 = vpack.c.bf16 %v1541, %v1541
        %v1558 = vpack.c.bf16 %v1542, %v1542
        %v1559 = vpack.c.bf16 %v1543, %v1543
        %v1560 = vpack.c.bf16 %v1544, %v1544
        %v1561 = vpack.c.bf16 %v1545, %v1545
        %v1562 = vpack.c.bf16 %v1546, %v1546
        %v1563 = vpack.c.bf16 %v1547, %v1547
        %v1564 = vpack.c.bf16 %v1548, %v1548
        %vm1565 = vcmask 519168
        %1566 = vst.msk [vmem:[%s438] sm:$0xf] %vm1565, %v1549
        %1567 = vst.msk [vmem:[%s438 + $0x4] sm:$0xf] %vm1565, %v1550
        %1568 = vst.msk [vmem:[%s438 + $0x8] sm:$0xf] %vm1565, %v1551
        %1569 = vst.msk [vmem:[%s438 + $0xc] sm:$0xf] %vm1565, %v1552
        %1570 = vst.msk [vmem:[%s438 + $0x10] sm:$0xf] %vm1565, %v1553
        %1571 = vst.msk [vmem:[%s438 + $0x14] sm:$0xf] %vm1565, %v1554
        %1572 = vst.msk [vmem:[%s438 + $0x18] sm:$0xf] %vm1565, %v1555
        %1573 = vst.msk [vmem:[%s438 + $0x1c] sm:$0xf] %vm1565, %v1556
        %1574 = vst.msk [vmem:[%s438 + $0x20] sm:$0xf] %vm1565, %v1557
        %1575 = vst.msk [vmem:[%s438 + $0x24] sm:$0xf] %vm1565, %v1558
        %1576 = vst.msk [vmem:[%s438 + $0x28] sm:$0xf] %vm1565, %v1559
        %1577 = vst.msk [vmem:[%s438 + $0x2c] sm:$0xf] %vm1565, %v1560
        %1578 = vst.msk [vmem:[%s438 + $0x30] sm:$0xf] %vm1565, %v1561
        %1579 = vst.msk [vmem:[%s438 + $0x34] sm:$0xf] %vm1565, %v1562
        %1580 = vst.msk [vmem:[%s438 + $0x38] sm:$0xf] %vm1565, %v1563
        %1581 = vst.msk [vmem:[%s438 + $0x3c] sm:$0xf] %vm1565, %v1564
      $region52: #{tpu_custom_call.1} parent=43 // pred_fallthru
        _
      %s1582 = smul.u32 16, %s23
      %p1583 = scmp.lt.s32.totalorder %s22, 1
      %s1584 = scalar_select %p1583, %s22, 1
      %p1585 = scmp.lt.s32.totalorder %s1582, 15
      %s1586 = scalar_select %p1585, %s1582, 15
      %s1587 = smul.addr %s1584, 16
      %s1588 = sadd.s32 %s1586, %s1587
      %s1589 = smul.addr %s1588, 4
      %s1590 = scalar_lea.vmem %s6, %s1589
      // Predicated region
      $region53: #{tpu_custom_call.1} parent=43 // pred_check
        %p1591 = pneg %p222
      $region54: #{tpu_custom_call.1} parent=43 // pred_check_branch
        %1593 = sbr.rel (%p1591) target = $region56
      $region55: #{tpu_custom_call.1} parent=43 // pred_region
        %s1594 = smul.u32 16, %s23
      $region56: #{tpu_custom_call.1} parent=43 // pred_fallthru
        _
    $region44: #{tpu_custom_call.1} parent=5 // pred_fallthru
      _
    %p1595 = scmp.le.s32.totalorder 2, %s12
    // Predicated region
    $region57: #{tpu_custom_call.1} parent=5 // pred_check
      %p1596 = pneg %p1595
    $region58: #{tpu_custom_call.1} parent=5 // pred_check_branch
      %1598 = sbr.rel (%p1596) target = $region60
    $region59: #{tpu_custom_call.1} parent=5 // pred_region
      %s1599 = ssub.s32 %s12, 2
      // Predicated region
      $region61: #{tpu_custom_call.1} parent=59 // pred_check
        %p1600 = pneg %p228
      $region62: #{tpu_custom_call.1} parent=59 // pred_check_branch
        %1602 = sbr.rel (%p1600) target = $region64
      $region63: #{tpu_custom_call.1} parent=59 // pred_region
        %s1603 = smul.u32 16, %s26
        %p1604 = scmp.lt.s32.totalorder %s25, 1
        %s1605 = scalar_select %p1604, %s25, 1
        %p1606 = scmp.lt.s32.totalorder %s1603, 15
        %s1607 = scalar_select %p1606, %s1603, 15
        %s1608 = smul.addr %s1605, 16
        %s1609 = sadd.s32 %s1607, %s1608
        %s1610 = smul.addr %s1609, 4
        %s1611 = scalar_lea.vmem %s6, %s1610
      $region64: #{tpu_custom_call.1} parent=59 // pred_fallthru
        _
    $region60: #{tpu_custom_call.1} parent=5 // pred_fallthru
      _
  $region6: #{tpu_custom_call.1} parent=0 // loop_footer
    %s16 = sadd.s32 1, %s12
  $region7: #{tpu_custom_call.1} parent=0 // loop_footer_branch
    %11 = sbr.rel target = $region3
  $region8: #{tpu_custom_call.1} parent=0 // loop_exit
    _

</llo_original>
